<compile_context>
chip_gen: v6e
topology: v6e:2x2x1
jax: 0.10.0
libtpu: 0.0.40
codegen_flags: <defaults>
</compile_context>

<pallas_src>
import functools

import jax
import jax.numpy as jnp
from jax import lax
from jax.scipy.special import logsumexp
from jax.experimental import pallas as pl
from jax.experimental.pallas import tpu as pltpu


def _pair_ce_kernel(a_ref, b_ref,
                    loss_row_ref, loss_col_ref, acc_row_ref, acc_col_ref,
                    r_max, r_sum, r_arg,
                    c_max, c_sum, c_arg,
                    s_row_lse, s_col_lse, s_diag, s_all,
                    s_row_correct, s_col_correct,
                    *, eps, batch):
    qi = pl.program_id(0)
    ki = pl.program_id(1)
    nq = pl.num_programs(0)
    nk = pl.num_programs(1)
    tq = a_ref.shape[0]
    tk = b_ref.shape[0]
    big = jnp.int32(2 ** 30)

    # ---------------- init ----------------
    @pl.when(jnp.logical_and(qi == 0, ki == 0))
    def _init_scalars():
        for s in (s_row_lse, s_col_lse, s_diag, s_all,
                  s_row_correct, s_col_correct):
            s[...] = jnp.zeros_like(s)

    @pl.when(ki == 0)
    def _init_rows():
        r_max[...] = jnp.full_like(r_max, -jnp.inf)
        r_sum[...] = jnp.zeros_like(r_sum)
        r_arg[...] = jnp.zeros_like(r_arg)

    @pl.when(qi == 0)
    def _init_cols():
        c_max[ki] = jnp.full((1, tk), -jnp.inf, dtype=jnp.float32)
        c_sum[ki] = jnp.zeros((1, tk), dtype=jnp.float32)
        c_arg[ki] = jnp.zeros((1, tk), dtype=jnp.int32)

    # ---------------- logits tile (MXU) ----------------
    a = a_ref[...]                      # (tq, D), scale already folded in
    b = b_ref[...]                      # (tk, D)
    logits = lax.dot_general(a, b, (((1,), (1,)), ((), ())),
                             preferred_element_type=jnp.float32)  # (tq, tk) f32

    if eps:  # label smoothing needs the total sum of all logits
        s_all[...] += jnp.sum(logits, keepdims=True)

    # ---------------- diagonal (target) logits ----------------
    @pl.when(ki == qi)   # requires tq == tk
    def _diag():
        d = jnp.sum(a.astype(jnp.float32) * b.astype(jnp.float32),
                    axis=-1, keepdims=True)                     # (tq, 1)
        s_diag[...] += jnp.sum(d, keepdims=True)

    # ---------------- row (image-direction) online update ----------------
    t_rmax = jnp.max(logits, axis=1, keepdims=True)             # (tq, 1)
    old_rmax = r_max[...]
    new_rmax = jnp.maximum(old_rmax, t_rmax)
    col_ids = ki * tk + lax.broadcasted_iota(jnp.int32, (tq, tk), 1)
    t_rarg = jnp.min(jnp.where(logits >= t_rmax, col_ids, big),
                     axis=1, keepdims=True)                     # first argmax
    r_sum[...] = (r_sum[...] * jnp.exp(old_rmax - new_rmax)
                  + jnp.sum(jnp.exp(logits - new_rmax), axis=1, keepdims=True))
    r_arg[...] = jnp.where(t_rmax > old_rmax, t_rarg, r_arg[...])
    r_max[...] = new_rmax

    # ---------------- column (text-direction) online update ----------------
    t_cmax = jnp.max(logits, axis=0, keepdims=True)             # (1, tk)
    old_cmax = c_max[ki]
    new_cmax = jnp.maximum(old_cmax, t_cmax)
    row_ids = qi * tq + lax.broadcasted_iota(jnp.int32, (tq, tk), 0)
    t_carg = jnp.min(jnp.where(logits >= t_cmax, row_ids, big),
                     axis=0, keepdims=True)
    c_sum[ki] = (c_sum[ki] * jnp.exp(old_cmax - new_cmax)
                 + jnp.sum(jnp.exp(logits - new_cmax), axis=0, keepdims=True))
    c_arg[ki] = jnp.where(t_cmax > old_cmax, t_carg, c_arg[ki])
    c_max[ki] = new_cmax

    # ---------------- per-query-tile row finalize ----------------
    @pl.when(ki == nk - 1)
    def _row_final():
        r_lse = r_max[...] + jnp.log(r_sum[...])
        s_row_lse[...] += jnp.sum(r_lse, keepdims=True)
        row_lab = qi * tq + lax.broadcasted_iota(jnp.int32, (tq, 1), 0)
        s_row_correct[...] += jnp.sum(
            (r_arg[...] == row_lab).astype(jnp.float32), keepdims=True)

    # ---------------- per-key-tile column finalize ----------------
    @pl.when(qi == nq - 1)
    def _col_final():
        c_lse = c_max[ki] + jnp.log(c_sum[ki])
        s_col_lse[...] += jnp.sum(c_lse, keepdims=True)
        col_lab = ki * tk + lax.broadcasted_iota(jnp.int32, (1, tk), 1)
        s_col_correct[...] += jnp.sum(
            (c_arg[ki] == col_lab).astype(jnp.float32), keepdims=True)

    # ---------------- global finalize ----------------
    @pl.when(jnp.logical_and(qi == nq - 1, ki == nk - 1))
    def _final():
        inv_b = jnp.float32(1.0 / batch)
        one_m_eps = jnp.float32(1.0 - eps)
        if eps:
            smooth = jnp.float32(eps / batch) * s_all[...]
        else:
            smooth = jnp.zeros((1, 1), jnp.float32)
        sd = s_diag[...]
        loss_row_ref[...] = (s_row_lse[...] - one_m_eps * sd - smooth) * inv_b
        loss_col_ref[...] = (s_col_lse[...] - one_m_eps * sd - smooth) * inv_b
        acc_row_ref[...] = jnp.float32(100.0) * s_row_correct[...] * inv_b
        acc_col_ref[...] = jnp.float32(100.0) * s_col_correct[...] * inv_b


def _pick_tile(batch):
    # Multiples of 16 keep bf16 sublane packing happy; 128/256 match the MXU.
    for t in (256, 128, 64, 32, 16):
        if batch % t == 0:
            return t
    return batch  # full-batch block (always legal: equals the array dim)


def _pair_contrastive_ce(a, b, *, label_smoothing, tile):
    """Both-direction contrastive CE + accuracy for logits = a @ b.T.

    `a` must already carry the logit scale. Returns
    (row_loss, col_loss, row_acc, col_acc) == (image-side, text-side).
    """
    batch, dim = a.shape
    assert b.shape == (batch, dim)
    tq = tk = tile
    assert batch % tq == 0, (batch, tq)
    nq, nk = batch // tq, batch // tk

    kernel = functools.partial(_pair_ce_kernel,
                               eps=float(label_smoothing), batch=batch)
    out_shape = tuple(jax.ShapeDtypeStruct((1, 1), jnp.float32)
                      for _ in range(4))
    lr, lc, ar, ac = pl.pallas_call(
        kernel,
        out_shape=out_shape,
        grid_spec=pltpu.PrefetchScalarGridSpec(
            num_scalar_prefetch=0,
            grid=(nq, nk),
            in_specs=[
                pl.BlockSpec((tq, dim), lambda qi, ki: (qi, 0)),
                pl.BlockSpec((tk, dim), lambda qi, ki: (ki, 0)),
            ],
            out_specs=tuple(pl.BlockSpec((1, 1), lambda qi, ki: (0, 0))
                            for _ in range(4)),
            scratch_shapes=[
                pltpu.VMEM((tq, 1), jnp.float32),        # r_max
                pltpu.VMEM((tq, 1), jnp.float32),        # r_sum
                pltpu.VMEM((tq, 1), jnp.int32),          # r_arg
                pltpu.VMEM((nk, 1, tk), jnp.float32),    # c_max
                pltpu.VMEM((nk, 1, tk), jnp.float32),    # c_sum
                pltpu.VMEM((nk, 1, tk), jnp.int32),      # c_arg
            ] + [pltpu.VMEM((1, 1), jnp.float32) for _ in range(6)],
        ),
        compiler_params=pltpu.CompilerParams(
            # Both axes carry cross-iteration scratch state (column + scalar
            # accumulators), so neither may be megacore-sharded.
            dimension_semantics=("arbitrary", "arbitrary"),
            vmem_limit_bytes=32 * 1024 * 1024,
        ),
    )(a, b)
    return lr[0, 0], lc[0, 0], ar[0, 0], ac[0, 0]


def _l2_normalize(x, eps=1e-12):
    # F.normalize(x, dim=-1): x / max(||x||, eps)  ==  x * rsqrt(max(ssq, eps^2))
    x = x.astype(jnp.float32)
    ssq = jnp.sum(x * x, axis=-1, keepdims=True)
    return x * lax.rsqrt(jnp.maximum(ssq, eps * eps))


def cl2l_loss(outputs, *, loss_avg_or_sum='avg', label_smoothing=0.1,
              tile=None, matmul_dtype=jnp.bfloat16):
    """JAX/Pallas equivalent of CL2LLoss.forward on a single device."""
    z_image = outputs['z_image_global']
    z_text = outputs['z_text_global']
    h_image = outputs['h_image_local']
    h_text = outputs['h_text_local']
    logit_scale = outputs['logit_scale']
    h_logit_scale = outputs['h_logit_scale']

    assert len(h_image) == len(h_text)
    num_augs = len(h_image)
    batch = z_image.shape[0]
    t = _pick_tile(batch) if tile is None else tile

    def pair(a_n, b_n, scale, eps):
        # Fold the traced logit scale into one operand (fuses with the
        # normalization multiply); bf16 MXU operands, f32 accumulation.
        a_q = (a_n * scale).astype(matmul_dtype)
        b_q = b_n.astype(matmul_dtype)
        return _pair_contrastive_ce(a_q, b_q, label_smoothing=eps, tile=t)

    zi_n = _l2_normalize(z_image)
    zt_n = _l2_normalize(z_text)
    hi_n = [_l2_normalize(h) for h in h_image]
    ht_n = [_l2_normalize(h) for h in h_text]

    # Global CLIP loss: rows = image->text CE/acc, cols = text->image CE/acc.
    li_g, lt_g, ai_g, at_g = pair(zi_n, zt_n, logit_scale, 0.0)

    li_l = lt_l = ai_l = at_l = 0.0
    if num_augs > 0:
        for ia in range(num_augs):
            for it in range(num_augs):
                lr, lc, ar, ac = pair(hi_n[ia], ht_n[it], h_logit_scale,
                                      label_smoothing)
                li_l = li_l + lr
                lt_l = lt_l + lc
                ai_l = ai_l + ar
                at_l = at_l + ac
        n2 = float(num_augs * num_augs)
        li_l, lt_l, ai_l, at_l = li_l / n2, lt_l / n2, ai_l / n2, at_l / n2

    clip_loss_image = (li_g + li_l * num_augs) / (1 + num_augs)
    clip_loss_text = (lt_g + lt_l * num_augs) / (1 + num_augs)
    clip_loss = (clip_loss_image + clip_loss_text) / 2
    loss = clip_loss * (2 if loss_avg_or_sum == 'sum' else 1)

    result = {
        'loss': loss,
        'clip_loss': clip_loss,
        'clip_loss_image': clip_loss_image,
        'clip_loss_text': clip_loss_text,
        'clip_loss_image_global': li_g,
        'clip_loss_text_global': lt_g,
        'clip_acc': ai_g,
        'clip_acc_image_global': ai_g,
        'clip_acc_text_global': at_g,
        'h_logit_scale': h_logit_scale,
    }
    if num_augs > 0:
        result.update({
            'clip_loss_image_local': li_l,
            'clip_loss_text_local': lt_l,
            'clip_acc_image_local': ai_l,
            'clip_acc_text_local': at_l,
        })
    return result


def _reference(outputs, *, loss_avg_or_sum='avg', label_smoothing=0.1,
               matmul_dtype=jnp.bfloat16):
    """Pure-JAX mirror of CL2LLoss.forward (single device).

    matmul_dtype=bfloat16 reproduces the kernel's operand quantization exactly
    (accumulation stays f32); matmul_dtype=float32 gives full-precision
    PyTorch semantics.
    """
    z_image = outputs['z_image_global']
    z_text = outputs['z_text_global']
    h_image = outputs['h_image_local']
    h_text = outputs['h_text_local']
    logit_scale = outputs['logit_scale']
    h_logit_scale = outputs['h_logit_scale']
    num_augs = len(h_image)
    batch = z_image.shape[0]
    labels = jnp.arange(batch)

    def q(x):
        return x.astype(matmul_dtype).astype(jnp.float32)

    def logits_of(a_n, b_n, scale):
        return q(a_n * scale) @ q(b_n).T

    def ce(lg, eps):
        lse = logsumexp(lg, axis=-1)
        diag = lg[labels, labels]
        return jnp.mean(lse - (1.0 - eps) * diag - eps * jnp.mean(lg, axis=-1))

    def acc(lg):
        pred = jnp.argmax(lg, axis=-1)
        return 100.0 * jnp.mean((pred == labels).astype(jnp.float32))

    zi_n = _l2_normalize(z_image)
    zt_n = _l2_normalize(z_text)
    hi_n = [_l2_normalize(h) for h in h_image]
    ht_n = [_l2_normalize(h) for h in h_text]

    lg_g = logits_of(zi_n, zt_n, logit_scale)
    li_g, lt_g = ce(lg_g, 0.0), ce(lg_g.T, 0.0)
    ai_g, at_g = acc(lg_g), acc(lg_g.T)

    li_l = lt_l = ai_l = at_l = 0.0
    if num_augs > 0:
        for ia in range(num_augs):
            for it in range(num_augs):
                lg = logits_of(hi_n[ia], ht_n[it], h_logit_scale)
                li_l += ce(lg, label_smoothing)
                lt_l += ce(lg.T, label_smoothing)
                ai_l += acc(lg)
                at_l += acc(lg.T)
        n2 = float(num_augs * num_augs)
        li_l, lt_l, ai_l, at_l = li_l / n2, lt_l / n2, ai_l / n2, at_l / n2

    clip_loss_image = (li_g + li_l * num_augs) / (1 + num_augs)
    clip_loss_text = (lt_g + lt_l * num_augs) / (1 + num_augs)
    clip_loss = (clip_loss_image + clip_loss_text) / 2
    loss = clip_loss * (2 if loss_avg_or_sum == 'sum' else 1)

    result = {
        'loss': loss, 'clip_loss': clip_loss,
        'clip_loss_image': clip_loss_image, 'clip_loss_text': clip_loss_text,
        'clip_loss_image_global': li_g, 'clip_loss_text_global': lt_g,
        'clip_acc': ai_g, 'clip_acc_image_global': ai_g,
        'clip_acc_text_global': at_g, 'h_logit_scale': h_logit_scale,
    }
    if num_augs > 0:
        result.update({
            'clip_loss_image_local': li_l, 'clip_loss_text_local': lt_l,
            'clip_acc_image_local': ai_l, 'clip_acc_text_local': at_l,
        })
    return result


if __name__ == "__main__":
    key = jax.random.PRNGKey(0)
    B, D, NUM_AUGS = 32, 32, 2
    LABEL_SMOOTHING = 0.1
    LOSS_AVG_OR_SUM = 'avg'

    keys = jax.random.split(key, 2 + 2 * NUM_AUGS)
    z_image = jax.random.normal(keys[0], (B, D), jnp.float32)
    z_text = jax.random.normal(keys[1], (B, D), jnp.float32)
    h_image = [jax.random.normal(keys[2 + i], (B, D), jnp.float32)
               for i in range(NUM_AUGS)]
    h_text = [jax.random.normal(keys[2 + NUM_AUGS + i], (B, D), jnp.float32)
              for i in range(NUM_AUGS)]
    outputs = {
        'z_image_global': z_image,
        'z_text_global': z_text,
        'h_image_local': h_image,
        'h_text_local': h_text,
        'logit_scale': jnp.float32(1.0 / 0.07),   # CLIP init exp(log(1/0.07))
        'h_logit_scale': jnp.float32(1.0 / 0.1),
    }

    # tile=16 forces a (2, 2) grid so the online row/column accumulation paths
    # are exercised even at this small test batch.
    res = cl2l_loss(outputs, loss_avg_or_sum=LOSS_AVG_OR_SUM,
                    label_smoothing=LABEL_SMOOTHING, tile=16)
    jax.block_until_ready(res['loss'])

    # Reference with matched bf16 operand quantization (f32 accumulation).
    ref = _reference(outputs, loss_avg_or_sum=LOSS_AVG_OR_SUM,
                     label_smoothing=LABEL_SMOOTHING,
                     matmul_dtype=jnp.bfloat16)
    keys_to_check = [
        'loss', 'clip_loss', 'clip_loss_image', 'clip_loss_text',
        'clip_loss_image_global', 'clip_loss_text_global',
        'clip_loss_image_local', 'clip_loss_text_local',
        'clip_acc', 'clip_acc_image_global', 'clip_acc_text_global',
        'clip_acc_image_local', 'clip_acc_text_local',
    ]
    for k in keys_to_check:
        assert jnp.allclose(res[k], ref[k], atol=2e-4, rtol=2e-4), (
            k, res[k], ref[k])

    # Loose semantic sanity check against the full-f32 (PyTorch-exact) math;
    # only the loss is checked because bf16 operands may flip near-tie argmax.
    ref32 = _reference(outputs, loss_avg_or_sum=LOSS_AVG_OR_SUM,
                       label_smoothing=LABEL_SMOOTHING,
                       matmul_dtype=jnp.float32)
    assert jnp.allclose(res['loss'], ref32['loss'], atol=0.1), (
        res['loss'], ref32['loss'])

    print("KERNEL_OK")
</pallas_src>

<mosaic_0001>
module attributes {stable_mosaic.version = 11 : i64} {
  func.func @_pair_ce_kernel(%arg0: i32, %arg1: i32, %arg2: memref<16x32xbf16, #tpu.memory_space<vmem>>, %arg3: memref<16x32xbf16, #tpu.memory_space<vmem>>, %arg4: memref<1x1xf32, #tpu.memory_space<vmem>>, %arg5: memref<1x1xf32, #tpu.memory_space<vmem>>, %arg6: memref<1x1xf32, #tpu.memory_space<vmem>>, %arg7: memref<1x1xf32, #tpu.memory_space<vmem>>, %arg8: memref<16x1xf32, #tpu.memory_space<vmem>>, %arg9: memref<16x1xf32, #tpu.memory_space<vmem>>, %arg10: memref<16x1xi32, #tpu.memory_space<vmem>>, %arg11: memref<2x1x16xf32, #tpu.memory_space<vmem>>, %arg12: memref<2x1x16xf32, #tpu.memory_space<vmem>>, %arg13: memref<2x1x16xi32, #tpu.memory_space<vmem>>, %arg14: memref<1x1xf32, #tpu.memory_space<vmem>>, %arg15: memref<1x1xf32, #tpu.memory_space<vmem>>, %arg16: memref<1x1xf32, #tpu.memory_space<vmem>>, %arg17: memref<1x1xf32, #tpu.memory_space<vmem>>, %arg18: memref<1x1xf32, #tpu.memory_space<vmem>>, %arg19: memref<1x1xf32, #tpu.memory_space<vmem>>) attributes {dimension_semantics = [#tpu.dimension_semantics<arbitrary>, #tpu.dimension_semantics<arbitrary>], iteration_bounds = array<i64: 2, 2>, scalar_prefetch = 0 : i64, scratch_operands = 12 : i64, tpu.core_type = #tpu.core_type<tc>, window_params = [{transform_indices = @transform_0, window_bounds = array<i64: 16, 32>}, {transform_indices = @transform_1, window_bounds = array<i64: 16, 32>}, {pipeline_mode = #tpu.pipeline_mode<synchronous>, transform_indices = @transform_2, window_bounds = array<i64: 1, 1>}, {pipeline_mode = #tpu.pipeline_mode<synchronous>, transform_indices = @transform_3, window_bounds = array<i64: 1, 1>}, {pipeline_mode = #tpu.pipeline_mode<synchronous>, transform_indices = @transform_4, window_bounds = array<i64: 1, 1>}, {pipeline_mode = #tpu.pipeline_mode<synchronous>, transform_indices = @transform_5, window_bounds = array<i64: 1, 1>}]} {
    %c0_i32 = arith.constant 0 : i32
    %0 = arith.cmpi eq, %arg0, %c0_i32 : i32
    %c0_i32_0 = arith.constant 0 : i32
    %1 = arith.cmpi eq, %arg1, %c0_i32_0 : i32
    %2 = arith.andi %0, %1 : i1
    %3 = arith.extui %2 : i1 to i32
    %c0_i32_1 = arith.constant 0 : i32
    %4 = arith.cmpi ne, %3, %c0_i32_1 : i32
    scf.if %4 {
      %cst_48 = arith.constant 0.000000e+00 : f32
      %103 = vector.broadcast %cst_48 : f32 to vector<1x1xf32>
      %c0_49 = arith.constant 0 : index
      %c0_50 = arith.constant 0 : index
      %104 = vector.load %arg14[%c0_49, %c0_50] : memref<1x1xf32, #tpu.memory_space<vmem>>, vector<1x1xf32>
      tpu.vector_store %arg14[%c0_49, %c0_50], %103 {strides = array<i32>} : memref<1x1xf32, #tpu.memory_space<vmem>>, vector<1x1xf32>,
      %cst_51 = arith.constant 0.000000e+00 : f32
      %105 = vector.broadcast %cst_51 : f32 to vector<1x1xf32>
      %c0_52 = arith.constant 0 : index
      %c0_53 = arith.constant 0 : index
      %106 = vector.load %arg15[%c0_52, %c0_53] : memref<1x1xf32, #tpu.memory_space<vmem>>, vector<1x1xf32>
      tpu.vector_store %arg15[%c0_52, %c0_53], %105 {strides = array<i32>} : memref<1x1xf32, #tpu.memory_space<vmem>>, vector<1x1xf32>,
      %cst_54 = arith.constant 0.000000e+00 : f32
      %107 = vector.broadcast %cst_54 : f32 to vector<1x1xf32>
      %c0_55 = arith.constant 0 : index
      %c0_56 = arith.constant 0 : index
      %108 = vector.load %arg16[%c0_55, %c0_56] : memref<1x1xf32, #tpu.memory_space<vmem>>, vector<1x1xf32>
      tpu.vector_store %arg16[%c0_55, %c0_56], %107 {strides = array<i32>} : memref<1x1xf32, #tpu.memory_space<vmem>>, vector<1x1xf32>,
      %cst_57 = arith.constant 0.000000e+00 : f32
      %109 = vector.broadcast %cst_57 : f32 to vector<1x1xf32>
      %c0_58 = arith.constant 0 : index
      %c0_59 = arith.constant 0 : index
      %110 = vector.load %arg17[%c0_58, %c0_59] : memref<1x1xf32, #tpu.memory_space<vmem>>, vector<1x1xf32>
      tpu.vector_store %arg17[%c0_58, %c0_59], %109 {strides = array<i32>} : memref<1x1xf32, #tpu.memory_space<vmem>>, vector<1x1xf32>,
      %cst_60 = arith.constant 0.000000e+00 : f32
      %111 = vector.broadcast %cst_60 : f32 to vector<1x1xf32>
      %c0_61 = arith.constant 0 : index
      %c0_62 = arith.constant 0 : index
      %112 = vector.load %arg18[%c0_61, %c0_62] : memref<1x1xf32, #tpu.memory_space<vmem>>, vector<1x1xf32>
      tpu.vector_store %arg18[%c0_61, %c0_62], %111 {strides = array<i32>} : memref<1x1xf32, #tpu.memory_space<vmem>>, vector<1x1xf32>,
      %cst_63 = arith.constant 0.000000e+00 : f32
      %113 = vector.broadcast %cst_63 : f32 to vector<1x1xf32>
      %c0_64 = arith.constant 0 : index
      %c0_65 = arith.constant 0 : index
      %114 = vector.load %arg19[%c0_64, %c0_65] : memref<1x1xf32, #tpu.memory_space<vmem>>, vector<1x1xf32>
      tpu.vector_store %arg19[%c0_64, %c0_65], %113 {strides = array<i32>} : memref<1x1xf32, #tpu.memory_space<vmem>>, vector<1x1xf32>,
    } else {
    }
    %c0_i32_2 = arith.constant 0 : i32
    %5 = arith.cmpi eq, %arg1, %c0_i32_2 : i32
    %6 = arith.extui %5 : i1 to i32
    %c0_i32_3 = arith.constant 0 : i32
    %7 = arith.cmpi ne, %6, %c0_i32_3 : i32
    scf.if %7 {
      %cst_48 = arith.constant 0xFF800000 : f32
      %103 = vector.broadcast %cst_48 : f32 to vector<16x1xf32>
      %c0_49 = arith.constant 0 : index
      %c0_50 = arith.constant 0 : index
      %104 = vector.load %arg8[%c0_49, %c0_50] : memref<16x1xf32, #tpu.memory_space<vmem>>, vector<16x1xf32>
      tpu.vector_store %arg8[%c0_49, %c0_50], %103 {strides = array<i32>} : memref<16x1xf32, #tpu.memory_space<vmem>>, vector<16x1xf32>,
      %cst_51 = arith.constant 0.000000e+00 : f32
      %105 = vector.broadcast %cst_51 : f32 to vector<16x1xf32>
      %c0_52 = arith.constant 0 : index
      %c0_53 = arith.constant 0 : index
      %106 = vector.load %arg9[%c0_52, %c0_53] : memref<16x1xf32, #tpu.memory_space<vmem>>, vector<16x1xf32>
      tpu.vector_store %arg9[%c0_52, %c0_53], %105 {strides = array<i32>} : memref<16x1xf32, #tpu.memory_space<vmem>>, vector<16x1xf32>,
      %c0_i32_54 = arith.constant 0 : i32
      %107 = vector.broadcast %c0_i32_54 : i32 to vector<16x1xi32>
      %c0_55 = arith.constant 0 : index
      %c0_56 = arith.constant 0 : index
      %108 = vector.load %arg10[%c0_55, %c0_56] : memref<16x1xi32, #tpu.memory_space<vmem>>, vector<16x1xi32>
      tpu.vector_store %arg10[%c0_55, %c0_56], %107 {strides = array<i32>} : memref<16x1xi32, #tpu.memory_space<vmem>>, vector<16x1xi32>,
    } else {
    }
    %c0_i32_4 = arith.constant 0 : i32
    %8 = arith.cmpi eq, %arg0, %c0_i32_4 : i32
    %9 = arith.extui %8 : i1 to i32
    %c0_i32_5 = arith.constant 0 : i32
    %10 = arith.cmpi ne, %9, %c0_i32_5 : i32
    scf.if %10 {
      %cst_48 = arith.constant 0xFF800000 : f32
      %103 = vector.broadcast %cst_48 : f32 to vector<1x16xf32>
      %104 = arith.index_cast %arg1 : i32 to index
      %c0_49 = arith.constant 0 : index
      %c0_50 = arith.constant 0 : index
      %105 = vector.load %arg11[%104, %c0_49, %c0_50] : memref<2x1x16xf32, #tpu.memory_space<vmem>>, vector<1x1x16xf32>
      %106 = vector.shape_cast %105 : vector<1x1x16xf32> to vector<1x16xf32>
      %107 = vector.shape_cast %103 : vector<1x16xf32> to vector<1x1x16xf32>
      tpu.vector_store %arg11[%104, %c0_49, %c0_50], %107 {strides = array<i32>} : memref<2x1x16xf32, #tpu.memory_space<vmem>>, vector<1x1x16xf32>,
      %cst_51 = arith.constant 0.000000e+00 : f32
      %108 = vector.broadcast %cst_51 : f32 to vector<1x16xf32>
      %109 = arith.index_cast %arg1 : i32 to index
      %c0_52 = arith.constant 0 : index
      %c0_53 = arith.constant 0 : index
      %110 = vector.load %arg12[%109, %c0_52, %c0_53] : memref<2x1x16xf32, #tpu.memory_space<vmem>>, vector<1x1x16xf32>
      %111 = vector.shape_cast %110 : vector<1x1x16xf32> to vector<1x16xf32>
      %112 = vector.shape_cast %108 : vector<1x16xf32> to vector<1x1x16xf32>
      tpu.vector_store %arg12[%109, %c0_52, %c0_53], %112 {strides = array<i32>} : memref<2x1x16xf32, #tpu.memory_space<vmem>>, vector<1x1x16xf32>,
      %c0_i32_54 = arith.constant 0 : i32
      %113 = vector.broadcast %c0_i32_54 : i32 to vector<1x16xi32>
      %114 = arith.index_cast %arg1 : i32 to index
      %c0_55 = arith.constant 0 : index
      %c0_56 = arith.constant 0 : index
      %115 = vector.load %arg13[%114, %c0_55, %c0_56] : memref<2x1x16xi32, #tpu.memory_space<vmem>>, vector<1x1x16xi32>
      %116 = vector.shape_cast %115 : vector<1x1x16xi32> to vector<1x16xi32>
      %117 = vector.shape_cast %113 : vector<1x16xi32> to vector<1x1x16xi32>
      tpu.vector_store %arg13[%114, %c0_55, %c0_56], %117 {strides = array<i32>} : memref<2x1x16xi32, #tpu.memory_space<vmem>>, vector<1x1x16xi32>,
    } else {
    }
    %c0 = arith.constant 0 : index
    %c0_6 = arith.constant 0 : index
    %11 = vector.load %arg2[%c0, %c0_6] : memref<16x32xbf16, #tpu.memory_space<vmem>>, vector<16x32xbf16>
    %c0_7 = arith.constant 0 : index
    %c0_8 = arith.constant 0 : index
    %12 = vector.load %arg3[%c0_7, %c0_8] : memref<16x32xbf16, #tpu.memory_space<vmem>>, vector<16x32xbf16>
    %cst = arith.constant dense<0.000000e+00> : vector<16x16xf32>
    %13 = tpu.matmul %11, %12, %cst {dimension_numbers = #tpu.dot_dimension_numbers<[1], [1], [0], [0], [0, 0, 1, 0], [], []>} : vector<16x32xbf16>, vector<16x32xbf16>, vector<16x16xf32> -> vector<16x16xf32>
    %14 = arith.cmpi eq, %arg1, %arg0 : i32
    %15 = arith.extui %14 : i1 to i32
    %c0_i32_9 = arith.constant 0 : i32
    %16 = arith.cmpi ne, %15, %c0_i32_9 : i32
    scf.if %16 {
      %103 = arith.extf %11 : vector<16x32xbf16> to vector<16x32xf32>
      %104 = arith.extf %12 : vector<16x32xbf16> to vector<16x32xf32>
      %105 = arith.mulf %103, %104 : vector<16x32xf32>
      %cst_48 = arith.constant dense<0.000000e+00> : vector<16xf32>
      %106 = vector.multi_reduction <add>, %105, %cst_48 [1] : vector<16x32xf32> to vector<16xf32>
      %107 = vector.shape_cast %106 : vector<16xf32> to vector<16x1xf32>
      %c0_49 = arith.constant 0 : index
      %c0_50 = arith.constant 0 : index
      %108 = vector.load %arg16[%c0_49, %c0_50] : memref<1x1xf32, #tpu.memory_space<vmem>>, vector<1x1xf32>
      %109 = vector.shape_cast %107 : vector<16x1xf32> to vector<1x16x1xf32>
      %cst_51 = arith.constant dense<0.000000e+00> : vector<1xf32>
      %110 = vector.multi_reduction <add>, %109, %cst_51 [1, 2] : vector<1x16x1xf32> to vector<1xf32>
      %111 = vector.shape_cast %110 : vector<1xf32> to vector<1x1x1xf32>
      %112 = vector.extract %111[0, 0, 0] : f32 from vector<1x1x1xf32>
      %113 = vector.broadcast %112 : f32 to vector<1x1xf32>
      %114 = arith.addf %108, %113 : vector<1x1xf32>
      %c0_52 = arith.constant 0 : index
      %c0_53 = arith.constant 0 : index
      %115 = vector.load %arg16[%c0_52, %c0_53] : memref<1x1xf32, #tpu.memory_space<vmem>>, vector<1x1xf32>
      tpu.vector_store %arg16[%c0_52, %c0_53], %114 {strides = array<i32>} : memref<1x1xf32, #tpu.memory_space<vmem>>, vector<1x1xf32>,
    } else {
    }
    %cst_10 = arith.constant dense<0xFF800000> : vector<16xf32>
    %17 = vector.multi_reduction <maximumf>, %13, %cst_10 [1] : vector<16x16xf32> to vector<16xf32>
    %18 = vector.shape_cast %17 : vector<16xf32> to vector<16x1xf32>
    %c0_11 = arith.constant 0 : index
    %c0_12 = arith.constant 0 : index
    %19 = vector.load %arg8[%c0_11, %c0_12] : memref<16x1xf32, #tpu.memory_space<vmem>>, vector<16x1xf32>
    %20 = arith.maximumf %19, %18 : vector<16x1xf32>
    %c16_i32 = arith.constant 16 : i32
    %21 = arith.muli %arg1, %c16_i32 : i32
    %22 = tpu.iota {dimensions = array<i32: 1>} : vector<16x16xi32>
    %23 = vector.broadcast %21 : i32 to vector<16x16xi32>
    %24 = arith.addi %23, %22 : vector<16x16xi32>
    %25 = vector.broadcast %18 : vector<16x1xf32> to vector<16x16xf32>
    %26 = arith.cmpf oge, %13, %25 : vector<16x16xf32>
    %c1073741824_i32 = arith.constant 1073741824 : i32
    %27 = vector.broadcast %c1073741824_i32 : i32 to vector<16x16xi32>
    %28 = arith.select %26, %24, %27 : vector<16x16xi1>, vector<16x16xi32>
    %cst_13 = arith.constant dense<2147483647> : vector<16xi32>
    %29 = vector.multi_reduction <minsi>, %28, %cst_13 [1] : vector<16x16xi32> to vector<16xi32>
    %30 = vector.shape_cast %29 : vector<16xi32> to vector<16x1xi32>
    %c0_14 = arith.constant 0 : index
    %c0_15 = arith.constant 0 : index
    %31 = vector.load %arg9[%c0_14, %c0_15] : memref<16x1xf32, #tpu.memory_space<vmem>>, vector<16x1xf32>
    %32 = arith.subf %19, %20 : vector<16x1xf32>
    %33 = math.exp %32 : vector<16x1xf32>
    %34 = arith.mulf %31, %33 : vector<16x1xf32>
    %35 = vector.broadcast %20 : vector<16x1xf32> to vector<16x16xf32>
    %36 = arith.subf %13, %35 : vector<16x16xf32>
    %37 = math.exp %36 : vector<16x16xf32>
    %cst_16 = arith.constant dense<0.000000e+00> : vector<16xf32>
    %38 = vector.multi_reduction <add>, %37, %cst_16 [1] : vector<16x16xf32> to vector<16xf32>
    %39 = vector.shape_cast %38 : vector<16xf32> to vector<16x1xf32>
    %40 = arith.addf %34, %39 : vector<16x1xf32>
    %c0_17 = arith.constant 0 : index
    %c0_18 = arith.constant 0 : index
    %41 = vector.load %arg9[%c0_17, %c0_18] : memref<16x1xf32, #tpu.memory_space<vmem>>, vector<16x1xf32>
    tpu.vector_store %arg9[%c0_17, %c0_18], %40 {strides = array<i32>} : memref<16x1xf32, #tpu.memory_space<vmem>>, vector<16x1xf32>,
    %42 = arith.cmpf ogt, %18, %19 : vector<16x1xf32>
    %c0_19 = arith.constant 0 : index
    %c0_20 = arith.constant 0 : index
    %43 = vector.load %arg10[%c0_19, %c0_20] : memref<16x1xi32, #tpu.memory_space<vmem>>, vector<16x1xi32>
    %44 = arith.select %42, %30, %43 : vector<16x1xi1>, vector<16x1xi32>
    %c0_21 = arith.constant 0 : index
    %c0_22 = arith.constant 0 : index
    %45 = vector.load %arg10[%c0_21, %c0_22] : memref<16x1xi32, #tpu.memory_space<vmem>>, vector<16x1xi32>
    tpu.vector_store %arg10[%c0_21, %c0_22], %44 {strides = array<i32>} : memref<16x1xi32, #tpu.memory_space<vmem>>, vector<16x1xi32>,
    %c0_23 = arith.constant 0 : index
    %c0_24 = arith.constant 0 : index
    %46 = vector.load %arg8[%c0_23, %c0_24] : memref<16x1xf32, #tpu.memory_space<vmem>>, vector<16x1xf32>
    tpu.vector_store %arg8[%c0_23, %c0_24], %20 {strides = array<i32>} : memref<16x1xf32, #tpu.memory_space<vmem>>, vector<16x1xf32>,
    %cst_25 = arith.constant dense<0xFF800000> : vector<16xf32>
    %47 = vector.multi_reduction <maximumf>, %13, %cst_25 [0] : vector<16x16xf32> to vector<16xf32>
    %48 = vector.shape_cast %47 : vector<16xf32> to vector<1x16xf32>
    %49 = arith.index_cast %arg1 : i32 to index
    %c0_26 = arith.constant 0 : index
    %c0_27 = arith.constant 0 : index
    %50 = vector.load %arg11[%49, %c0_26, %c0_27] : memref<2x1x16xf32, #tpu.memory_space<vmem>>, vector<1x1x16xf32>
    %51 = vector.shape_cast %50 : vector<1x1x16xf32> to vector<1x16xf32>
    %52 = arith.maximumf %51, %48 : vector<1x16xf32>
    %c16_i32_28 = arith.constant 16 : i32
    %53 = arith.muli %arg0, %c16_i32_28 : i32
    %54 = tpu.iota {dimensions = array<i32: 0>} : vector<16x16xi32>
    %55 = vector.broadcast %53 : i32 to vector<16x16xi32>
    %56 = arith.addi %55, %54 : vector<16x16xi32>
    %57 = vector.broadcast %48 : vector<1x16xf32> to vector<16x16xf32>
    %58 = arith.cmpf oge, %13, %57 : vector<16x16xf32>
    %c1073741824_i32_29 = arith.constant 1073741824 : i32
    %59 = vector.broadcast %c1073741824_i32_29 : i32 to vector<16x16xi32>
    %60 = arith.select %58, %56, %59 : vector<16x16xi1>, vector<16x16xi32>
    %cst_30 = arith.constant dense<2147483647> : vector<16xi32>
    %61 = vector.multi_reduction <minsi>, %60, %cst_30 [0] : vector<16x16xi32> to vector<16xi32>
    %62 = vector.shape_cast %61 : vector<16xi32> to vector<1x16xi32>
    %63 = arith.index_cast %arg1 : i32 to index
    %c0_31 = arith.constant 0 : index
    %c0_32 = arith.constant 0 : index
    %64 = vector.load %arg12[%63, %c0_31, %c0_32] : memref<2x1x16xf32, #tpu.memory_space<vmem>>, vector<1x1x16xf32>
    %65 = vector.shape_cast %64 : vector<1x1x16xf32> to vector<1x16xf32>
    %66 = arith.subf %51, %52 : vector<1x16xf32>
    %67 = math.exp %66 : vector<1x16xf32>
    %68 = arith.mulf %65, %67 : vector<1x16xf32>
    %69 = vector.broadcast %52 : vector<1x16xf32> to vector<16x16xf32>
    %70 = arith.subf %13, %69 : vector<16x16xf32>
    %71 = math.exp %70 : vector<16x16xf32>
    %cst_33 = arith.constant dense<0.000000e+00> : vector<16xf32>
    %72 = vector.multi_reduction <add>, %71, %cst_33 [0] : vector<16x16xf32> to vector<16xf32>
    %73 = vector.shape_cast %72 : vector<16xf32> to vector<1x16xf32>
    %74 = arith.addf %68, %73 : vector<1x16xf32>
    %75 = arith.index_cast %arg1 : i32 to index
    %c0_34 = arith.constant 0 : index
    %c0_35 = arith.constant 0 : index
    %76 = vector.load %arg12[%75, %c0_34, %c0_35] : memref<2x1x16xf32, #tpu.memory_space<vmem>>, vector<1x1x16xf32>
    %77 = vector.shape_cast %76 : vector<1x1x16xf32> to vector<1x16xf32>
    %78 = vector.shape_cast %74 : vector<1x16xf32> to vector<1x1x16xf32>
    tpu.vector_store %arg12[%75, %c0_34, %c0_35], %78 {strides = array<i32>} : memref<2x1x16xf32, #tpu.memory_space<vmem>>, vector<1x1x16xf32>,
    %79 = arith.cmpf ogt, %48, %51 : vector<1x16xf32>
    %80 = arith.index_cast %arg1 : i32 to index
    %c0_36 = arith.constant 0 : index
    %c0_37 = arith.constant 0 : index
    %81 = vector.load %arg13[%80, %c0_36, %c0_37] : memref<2x1x16xi32, #tpu.memory_space<vmem>>, vector<1x1x16xi32>
    %82 = vector.shape_cast %81 : vector<1x1x16xi32> to vector<1x16xi32>
    %83 = arith.select %79, %62, %82 : vector<1x16xi1>, vector<1x16xi32>
    %84 = arith.index_cast %arg1 : i32 to index
    %c0_38 = arith.constant 0 : index
    %c0_39 = arith.constant 0 : index
    %85 = vector.load %arg13[%84, %c0_38, %c0_39] : memref<2x1x16xi32, #tpu.memory_space<vmem>>, vector<1x1x16xi32>
    %86 = vector.shape_cast %85 : vector<1x1x16xi32> to vector<1x16xi32>
    %87 = vector.shape_cast %83 : vector<1x16xi32> to vector<1x1x16xi32>
    tpu.vector_store %arg13[%84, %c0_38, %c0_39], %87 {strides = array<i32>} : memref<2x1x16xi32, #tpu.memory_space<vmem>>, vector<1x1x16xi32>,
    %88 = arith.index_cast %arg1 : i32 to index
    %c0_40 = arith.constant 0 : index
    %c0_41 = arith.constant 0 : index
    %89 = vector.load %arg11[%88, %c0_40, %c0_41] : memref<2x1x16xf32, #tpu.memory_space<vmem>>, vector<1x1x16xf32>
    %90 = vector.shape_cast %89 : vector<1x1x16xf32> to vector<1x16xf32>
    %91 = vector.shape_cast %52 : vector<1x16xf32> to vector<1x1x16xf32>
    tpu.vector_store %arg11[%88, %c0_40, %c0_41], %91 {strides = array<i32>} : memref<2x1x16xf32, #tpu.memory_space<vmem>>, vector<1x1x16xf32>,
    %c1_i32 = arith.constant 1 : i32
    %92 = arith.cmpi eq, %arg1, %c1_i32 : i32
    %93 = arith.extui %92 : i1 to i32
    %c0_i32_42 = arith.constant 0 : i32
    %94 = arith.cmpi ne, %93, %c0_i32_42 : i32
    scf.if %94 {
      %c0_48 = arith.constant 0 : index
      %c0_49 = arith.constant 0 : index
      %103 = vector.load %arg8[%c0_48, %c0_49] : memref<16x1xf32, #tpu.memory_space<vmem>>, vector<16x1xf32>
      %c0_50 = arith.constant 0 : index
      %c0_51 = arith.constant 0 : index
      %104 = vector.load %arg9[%c0_50, %c0_51] : memref<16x1xf32, #tpu.memory_space<vmem>>, vector<16x1xf32>
      %105 = math.log %104 : vector<16x1xf32>
      %106 = arith.addf %103, %105 : vector<16x1xf32>
      %c0_52 = arith.constant 0 : index
      %c0_53 = arith.constant 0 : index
      %107 = vector.load %arg14[%c0_52, %c0_53] : memref<1x1xf32, #tpu.memory_space<vmem>>, vector<1x1xf32>
      %108 = vector.shape_cast %106 : vector<16x1xf32> to vector<1x16x1xf32>
      %cst_54 = arith.constant dense<0.000000e+00> : vector<1xf32>
      %109 = vector.multi_reduction <add>, %108, %cst_54 [1, 2] : vector<1x16x1xf32> to vector<1xf32>
      %110 = vector.shape_cast %109 : vector<1xf32> to vector<1x1x1xf32>
      %111 = vector.extract %110[0, 0, 0] : f32 from vector<1x1x1xf32>
      %112 = vector.broadcast %111 : f32 to vector<1x1xf32>
      %113 = arith.addf %107, %112 : vector<1x1xf32>
      %c0_55 = arith.constant 0 : index
      %c0_56 = arith.constant 0 : index
      %114 = vector.load %arg14[%c0_55, %c0_56] : memref<1x1xf32, #tpu.memory_space<vmem>>, vector<1x1xf32>
      tpu.vector_store %arg14[%c0_55, %c0_56], %113 {strides = array<i32>} : memref<1x1xf32, #tpu.memory_space<vmem>>, vector<1x1xf32>,
      %c16_i32_57 = arith.constant 16 : i32
      %115 = arith.muli %arg0, %c16_i32_57 : i32
      %116 = tpu.iota {dimensions = array<i32: 0>} : vector<16x1xi32>
      %117 = vector.broadcast %115 : i32 to vector<16x1xi32>
      %118 = arith.addi %117, %116 : vector<16x1xi32>
      %c0_58 = arith.constant 0 : index
      %c0_59 = arith.constant 0 : index
      %119 = vector.load %arg18[%c0_58, %c0_59] : memref<1x1xf32, #tpu.memory_space<vmem>>, vector<1x1xf32>
      %c0_60 = arith.constant 0 : index
      %c0_61 = arith.constant 0 : index
      %120 = vector.load %arg10[%c0_60, %c0_61] : memref<16x1xi32, #tpu.memory_space<vmem>>, vector<16x1xi32>
      %121 = arith.cmpi eq, %120, %118 : vector<16x1xi32>
      %122 = arith.extui %121 : vector<16x1xi1> to vector<16x1xi32>
      %123 = arith.sitofp %122 : vector<16x1xi32> to vector<16x1xf32>
      %124 = vector.shape_cast %123 : vector<16x1xf32> to vector<1x16x1xf32>
      %cst_62 = arith.constant dense<0.000000e+00> : vector<1xf32>
      %125 = vector.multi_reduction <add>, %124, %cst_62 [1, 2] : vector<1x16x1xf32> to vector<1xf32>
      %126 = vector.shape_cast %125 : vector<1xf32> to vector<1x1x1xf32>
      %127 = vector.extract %126[0, 0, 0] : f32 from vector<1x1x1xf32>
      %128 = vector.broadcast %127 : f32 to vector<1x1xf32>
      %129 = arith.addf %119, %128 : vector<1x1xf32>
      %c0_63 = arith.constant 0 : index
      %c0_64 = arith.constant 0 : index
      %130 = vector.load %arg18[%c0_63, %c0_64] : memref<1x1xf32, #tpu.memory_space<vmem>>, vector<1x1xf32>
      tpu.vector_store %arg18[%c0_63, %c0_64], %129 {strides = array<i32>} : memref<1x1xf32, #tpu.memory_space<vmem>>, vector<1x1xf32>,
    } else {
    }
    %c1_i32_43 = arith.constant 1 : i32
    %95 = arith.cmpi eq, %arg0, %c1_i32_43 : i32
    %96 = arith.extui %95 : i1 to i32
    %c0_i32_44 = arith.constant 0 : i32
    %97 = arith.cmpi ne, %96, %c0_i32_44 : i32
    scf.if %97 {
      %103 = arith.index_cast %arg1 : i32 to index
      %c0_48 = arith.constant 0 : index
      %c0_49 = arith.constant 0 : index
      %104 = vector.load %arg11[%103, %c0_48, %c0_49] : memref<2x1x16xf32, #tpu.memory_space<vmem>>, vector<1x1x16xf32>
      %105 = vector.shape_cast %104 : vector<1x1x16xf32> to vector<1x16xf32>
      %106 = arith.index_cast %arg1 : i32 to index
      %c0_50 = arith.constant 0 : index
      %c0_51 = arith.constant 0 : index
      %107 = vector.load %arg12[%106, %c0_50, %c0_51] : memref<2x1x16xf32, #tpu.memory_space<vmem>>, vector<1x1x16xf32>
      %108 = vector.shape_cast %107 : vector<1x1x16xf32> to vector<1x16xf32>
      %109 = math.log %108 : vector<1x16xf32>
      %110 = arith.addf %105, %109 : vector<1x16xf32>
      %c0_52 = arith.constant 0 : index
      %c0_53 = arith.constant 0 : index
      %111 = vector.load %arg15[%c0_52, %c0_53] : memref<1x1xf32, #tpu.memory_space<vmem>>, vector<1x1xf32>
      %112 = vector.shape_cast %110 : vector<1x16xf32> to vector<1x1x16xf32>
      %cst_54 = arith.constant dense<0.000000e+00> : vector<1xf32>
      %113 = vector.multi_reduction <add>, %112, %cst_54 [1, 2] : vector<1x1x16xf32> to vector<1xf32>
      %114 = vector.shape_cast %113 : vector<1xf32> to vector<1x1x1xf32>
      %115 = vector.extract %114[0, 0, 0] : f32 from vector<1x1x1xf32>
      %116 = vector.broadcast %115 : f32 to vector<1x1xf32>
      %117 = arith.addf %111, %116 : vector<1x1xf32>
      %c0_55 = arith.constant 0 : index
      %c0_56 = arith.constant 0 : index
      %118 = vector.load %arg15[%c0_55, %c0_56] : memref<1x1xf32, #tpu.memory_space<vmem>>, vector<1x1xf32>
      tpu.vector_store %arg15[%c0_55, %c0_56], %117 {strides = array<i32>} : memref<1x1xf32, #tpu.memory_space<vmem>>, vector<1x1xf32>,
      %c16_i32_57 = arith.constant 16 : i32
      %119 = arith.muli %arg1, %c16_i32_57 : i32
      %120 = tpu.iota {dimensions = array<i32: 1>} : vector<1x16xi32>
      %121 = vector.broadcast %119 : i32 to vector<1x16xi32>
      %122 = arith.addi %121, %120 : vector<1x16xi32>
      %c0_58 = arith.constant 0 : index
      %c0_59 = arith.constant 0 : index
      %123 = vector.load %arg19[%c0_58, %c0_59] : memref<1x1xf32, #tpu.memory_space<vmem>>, vector<1x1xf32>
      %124 = arith.index_cast %arg1 : i32 to index
      %c0_60 = arith.constant 0 : index
      %c0_61 = arith.constant 0 : index
      %125 = vector.load %arg13[%124, %c0_60, %c0_61] : memref<2x1x16xi32, #tpu.memory_space<vmem>>, vector<1x1x16xi32>
      %126 = vector.shape_cast %125 : vector<1x1x16xi32> to vector<1x16xi32>
      %127 = arith.cmpi eq, %126, %122 : vector<1x16xi32>
      %128 = arith.extui %127 : vector<1x16xi1> to vector<1x16xi32>
      %129 = arith.sitofp %128 : vector<1x16xi32> to vector<1x16xf32>
      %130 = vector.shape_cast %129 : vector<1x16xf32> to vector<1x1x16xf32>
      %cst_62 = arith.constant dense<0.000000e+00> : vector<1xf32>
      %131 = vector.multi_reduction <add>, %130, %cst_62 [1, 2] : vector<1x1x16xf32> to vector<1xf32>
      %132 = vector.shape_cast %131 : vector<1xf32> to vector<1x1x1xf32>
      %133 = vector.extract %132[0, 0, 0] : f32 from vector<1x1x1xf32>
      %134 = vector.broadcast %133 : f32 to vector<1x1xf32>
      %135 = arith.addf %123, %134 : vector<1x1xf32>
      %c0_63 = arith.constant 0 : index
      %c0_64 = arith.constant 0 : index
      %136 = vector.load %arg19[%c0_63, %c0_64] : memref<1x1xf32, #tpu.memory_space<vmem>>, vector<1x1xf32>
      tpu.vector_store %arg19[%c0_63, %c0_64], %135 {strides = array<i32>} : memref<1x1xf32, #tpu.memory_space<vmem>>, vector<1x1xf32>,
    } else {
    }
    %c1_i32_45 = arith.constant 1 : i32
    %98 = arith.cmpi eq, %arg0, %c1_i32_45 : i32
    %c1_i32_46 = arith.constant 1 : i32
    %99 = arith.cmpi eq, %arg1, %c1_i32_46 : i32
    %100 = arith.andi %98, %99 : i1
    %101 = arith.extui %100 : i1 to i32
    %c0_i32_47 = arith.constant 0 : i32
    %102 = arith.cmpi ne, %101, %c0_i32_47 : i32
    scf.if %102 {
      %cst_48 = arith.constant 0.000000e+00 : f32
      %103 = vector.broadcast %cst_48 : f32 to vector<1x1xf32>
      %c0_49 = arith.constant 0 : index
      %c0_50 = arith.constant 0 : index
      %104 = vector.load %arg16[%c0_49, %c0_50] : memref<1x1xf32, #tpu.memory_space<vmem>>, vector<1x1xf32>
      %c0_51 = arith.constant 0 : index
      %c0_52 = arith.constant 0 : index
      %105 = vector.load %arg14[%c0_51, %c0_52] : memref<1x1xf32, #tpu.memory_space<vmem>>, vector<1x1xf32>
      %cst_53 = arith.constant 1.000000e+00 : f32
      %106 = vector.broadcast %cst_53 : f32 to vector<1x1xf32>
      %107 = arith.mulf %106, %104 : vector<1x1xf32>
      %108 = arith.subf %105, %107 : vector<1x1xf32>
      %109 = arith.subf %108, %103 : vector<1x1xf32>
      %cst_54 = arith.constant 3.125000e-02 : f32
      %110 = vector.broadcast %cst_54 : f32 to vector<1x1xf32>
      %111 = arith.mulf %109, %110 : vector<1x1xf32>
      %c0_55 = arith.constant 0 : index
      %c0_56 = arith.constant 0 : index
      %112 = vector.load %arg4[%c0_55, %c0_56] : memref<1x1xf32, #tpu.memory_space<vmem>>, vector<1x1xf32>
      tpu.vector_store %arg4[%c0_55, %c0_56], %111 {strides = array<i32>} : memref<1x1xf32, #tpu.memory_space<vmem>>, vector<1x1xf32>,
      %c0_57 = arith.constant 0 : index
      %c0_58 = arith.constant 0 : index
      %113 = vector.load %arg15[%c0_57, %c0_58] : memref<1x1xf32, #tpu.memory_space<vmem>>, vector<1x1xf32>
      %cst_59 = arith.constant 1.000000e+00 : f32
      %114 = vector.broadcast %cst_59 : f32 to vector<1x1xf32>
      %115 = arith.mulf %114, %104 : vector<1x1xf32>
      %116 = arith.subf %113, %115 : vector<1x1xf32>
      %117 = arith.subf %116, %103 : vector<1x1xf32>
      %cst_60 = arith.constant 3.125000e-02 : f32
      %118 = vector.broadcast %cst_60 : f32 to vector<1x1xf32>
      %119 = arith.mulf %117, %118 : vector<1x1xf32>
      %c0_61 = arith.constant 0 : index
      %c0_62 = arith.constant 0 : index
      %120 = vector.load %arg5[%c0_61, %c0_62] : memref<1x1xf32, #tpu.memory_space<vmem>>, vector<1x1xf32>
      tpu.vector_store %arg5[%c0_61, %c0_62], %119 {strides = array<i32>} : memref<1x1xf32, #tpu.memory_space<vmem>>, vector<1x1xf32>,
      %c0_63 = arith.constant 0 : index
      %c0_64 = arith.constant 0 : index
      %121 = vector.load %arg18[%c0_63, %c0_64] : memref<1x1xf32, #tpu.memory_space<vmem>>, vector<1x1xf32>
      %cst_65 = arith.constant 1.000000e+02 : f32
      %122 = vector.broadcast %cst_65 : f32 to vector<1x1xf32>
      %123 = arith.mulf %122, %121 : vector<1x1xf32>
      %cst_66 = arith.constant 3.125000e-02 : f32
      %124 = vector.broadcast %cst_66 : f32 to vector<1x1xf32>
      %125 = arith.mulf %123, %124 : vector<1x1xf32>
      %c0_67 = arith.constant 0 : index
      %c0_68 = arith.constant 0 : index
      %126 = vector.load %arg6[%c0_67, %c0_68] : memref<1x1xf32, #tpu.memory_space<vmem>>, vector<1x1xf32>
      tpu.vector_store %arg6[%c0_67, %c0_68], %125 {strides = array<i32>} : memref<1x1xf32, #tpu.memory_space<vmem>>, vector<1x1xf32>,
      %c0_69 = arith.constant 0 : index
      %c0_70 = arith.constant 0 : index
      %127 = vector.load %arg19[%c0_69, %c0_70] : memref<1x1xf32, #tpu.memory_space<vmem>>, vector<1x1xf32>
      %cst_71 = arith.constant 1.000000e+02 : f32
      %128 = vector.broadcast %cst_71 : f32 to vector<1x1xf32>
      %129 = arith.mulf %128, %127 : vector<1x1xf32>
      %cst_72 = arith.constant 3.125000e-02 : f32
      %130 = vector.broadcast %cst_72 : f32 to vector<1x1xf32>
      %131 = arith.mulf %129, %130 : vector<1x1xf32>
      %c0_73 = arith.constant 0 : index
      %c0_74 = arith.constant 0 : index
      %132 = vector.load %arg7[%c0_73, %c0_74] : memref<1x1xf32, #tpu.memory_space<vmem>>, vector<1x1xf32>
      tpu.vector_store %arg7[%c0_73, %c0_74], %131 {strides = array<i32>} : memref<1x1xf32, #tpu.memory_space<vmem>>, vector<1x1xf32>,
    } else {
    }
    return
  }
  func.func @transform_0(%arg0: i32, %arg1: i32) -> (i32, i32) {
    %c0_i32 = arith.constant 0 : i32
    %c0_i32_0 = arith.constant 0 : i32
    return %arg0, %c0_i32 : i32, i32
  }
  func.func @transform_1(%arg0: i32, %arg1: i32) -> (i32, i32) {
    %c0_i32 = arith.constant 0 : i32
    %c0_i32_0 = arith.constant 0 : i32
    return %arg1, %c0_i32 : i32, i32
  }
  func.func @transform_2(%arg0: i32, %arg1: i32) -> (i32, i32) {
    %c0_i32 = arith.constant 0 : i32
    %c0_i32_0 = arith.constant 0 : i32
    %c0_i32_1 = arith.constant 0 : i32
    return %c0_i32, %c0_i32_0 : i32, i32
  }
  func.func @transform_3(%arg0: i32, %arg1: i32) -> (i32, i32) {
    %c0_i32 = arith.constant 0 : i32
    %c0_i32_0 = arith.constant 0 : i32
    %c0_i32_1 = arith.constant 0 : i32
    return %c0_i32, %c0_i32_0 : i32, i32
  }
  func.func @transform_4(%arg0: i32, %arg1: i32) -> (i32, i32) {
    %c0_i32 = arith.constant 0 : i32
    %c0_i32_0 = arith.constant 0 : i32
    %c0_i32_1 = arith.constant 0 : i32
    return %c0_i32, %c0_i32_0 : i32, i32
  }
  func.func @transform_5(%arg0: i32, %arg1: i32) -> (i32, i32) {
    %c0_i32 = arith.constant 0 : i32
    %c0_i32_0 = arith.constant 0 : i32
    %c0_i32_1 = arith.constant 0 : i32
    return %c0_i32, %c0_i32_0 : i32, i32
  }
}

</mosaic_0001>

<llo_original>
// kernel: tpu_custom_call.1
$region0: #{tpu_custom_call.1}
  #allocation0 [shape = 'u32[]', space=smem, size = 0x4, offset = 0x4, fixed_abs, tag = 'smem constant byte address 0x4 - core index']
  #allocation1 [shape = 'u32[144,128]{1,0:T(1,128)}', space=vmem, size = 0x12000, scoped, tag = 'internal scratch']
  #allocation2 [shape = 'f32[16,1]{1,0:T(8,128)}', space=vmem, size = 0x2000, scoped, tag = 'scratch operand']
  #allocation3 [shape = 'f32[16,1]{1,0:T(8,128)}', space=vmem, size = 0x2000, scoped, tag = 'scratch operand']
  #allocation4 [shape = 's32[16,1]{1,0:T(8,128)}', space=vmem, size = 0x2000, scoped, tag = 'scratch operand']
  #allocation5 [shape = 'f32[2,1,16]{2,1,0:T(1,128)}', space=vmem, size = 0x400, scoped, tag = 'scratch operand']
  #allocation6 [shape = 'f32[2,1,16]{2,1,0:T(1,128)}', space=vmem, size = 0x400, scoped, tag = 'scratch operand']
  #allocation7 [shape = 's32[2,1,16]{2,1,0:T(1,128)}', space=vmem, size = 0x400, scoped, tag = 'scratch operand']
  #allocation8 [shape = 'f32[1,1]{1,0:T(1,128)}', space=vmem, size = 0x200, scoped, tag = 'scratch operand']
  #allocation9 [shape = 'f32[1,1]{1,0:T(1,128)}', space=vmem, size = 0x200, scoped, tag = 'scratch operand']
  #allocation10 [shape = 'f32[1,1]{1,0:T(1,128)}', space=vmem, size = 0x200, scoped, tag = 'scratch operand']
  #allocation11 [shape = 'f32[1,1]{1,0:T(1,128)}', space=vmem, size = 0x200, scoped, tag = 'scratch operand']
  #allocation12 [shape = 'f32[1,1]{1,0:T(1,128)}', space=vmem, size = 0x200, scoped, tag = 'scratch operand']
  #allocation13 [shape = 'f32[1,1]{1,0:T(1,128)}', space=vmem, size = 0x200, scoped, tag = 'scratch operand']
  %s0 = inlined_call_operand.hbm [shape: bf16[32,32], index: 0, kind: input, shape index: {}]
  %s1 = inlined_call_operand.hbm [shape: bf16[32,32], index: 1, kind: input, shape index: {}]
  %s2 = inlined_call_operand.hbm [shape: f32[1,1], index: 2, kind: output, shape index: {0}]
  %s3 = inlined_call_operand.hbm [shape: f32[1,1], index: 3, kind: output, shape index: {1}]
  %s4 = inlined_call_operand.hbm [shape: f32[1,1], index: 4, kind: output, shape index: {2}]
  %s5 = inlined_call_operand.hbm [shape: f32[1,1], index: 5, kind: output, shape index: {3}]
  %6 = xla_tuple %s2, %s3, %s4, %s5
  %s7 = sld [smem:[#allocation0]]
  $region101: #{tpu_custom_call.1} parent=0
    _
  %s9 = ssub.s32 1, %s7
  %s10 = scalar_select 0, %s9, %s7
  $region1: #{tpu_custom_call.1} parent=0
    #allocation14 [shape = 'u8[8192]{0}', space=vmem, size = 0x2000, scoped, tag = 'input window, operand 0']
    #allocation15 [shape = 's32[2]{0}', space=sflag, size = 0x8, scoped, tag = 'scoped memory for tpu_custom_call.1']
    #allocation16 [shape = 's32[2]{0}', space=sflag, size = 0x8, scoped, tag = 'scoped memory for tpu_custom_call.1']
    #allocation17 [shape = 'u8[8192]{0}', space=vmem, size = 0x2000, scoped, tag = 'input window, operand 1']
    #allocation18 [shape = 's32[2]{0}', space=sflag, size = 0x8, scoped, tag = 'scoped memory for tpu_custom_call.1']
    #allocation19 [shape = 'u8[512]{0}', space=vmem, size = 0x400, scoped, tag = 'output window, operand 0, single buffered']
    #allocation20 [shape = 'u8[512]{0}', space=vmem, size = 0x400, scoped, tag = 'output window, operand 1, single buffered']
    #allocation21 [shape = 's32[1]{0}', space=sflag, size = 0x4, scoped, tag = 'scoped memory for tpu_custom_call.1']
    #allocation22 [shape = 'u8[512]{0}', space=vmem, size = 0x400, scoped, tag = 'output window, operand 2, single buffered']
    #allocation23 [shape = 'u8[512]{0}', space=vmem, size = 0x400, scoped, tag = 'output window, operand 3, single buffered']
    #allocation24 [shape = 's32[1]{0}', space=sflag, size = 0x4, scoped, tag = 'scoped memory for tpu_custom_call.1']
    %11 = vsyncpa [#allocation15], 0
    %s12 = scalar_lea.sflag [#allocation15], 1
    %13 = vsyncpa %s12, 0
    %14 = vsyncpa [#allocation18], 0
    %s15 = scalar_lea.sflag [#allocation18], 1
    %16 = vsyncpa %s15, 0
    %17 = vsyncpa [#allocation16], 0
    %18 = vsyncpa [#allocation21], 0
    %19 = vsyncpa [#allocation24], 0
    loop: start=0, step=1, limit=6
    $region2: #{tpu_custom_call.1} parent=1 // loop_pre_header
      _
    $region3: #{tpu_custom_call.1} parent=1 // loop_header
      %s21 = sphi 0, %s25
      %p22 = scmp.ge.s32.totalorder %s21, 6
      %s28 = sphi 0, %s40
      %s29 = sphi 0, %s36
      %s30 = sphi 0, %s28
      %s31 = sphi 0, %s29
      %s32 = sphi 0, %s30
      %s33 = sphi 0, %s31
      %s43 = sphi 0, %s45
      %s46 = sphi 0, %s43
      %s47 = sphi 0, %s46
      %s63 = sphi 0, %s47
      %s69 = sphi 0, %s71
      %s72 = sphi 0, %s69
      %s73 = sphi 0, %s72
      %s89 = sphi 0, %s73
      %s93 = sphi 0, %s93
      %s95 = sphi 0, %s93
      %s96 = sphi 0, %s95
      %s110 = sphi 0, %s96
      %s114 = sphi 0, %s114
      %s116 = sphi 0, %s114
      %s117 = sphi 0, %s116
      %s131 = sphi 0, %s117
      %s135 = sphi 0, %s135
      %s137 = sphi 0, %s135
      %s138 = sphi 0, %s137
      %s152 = sphi 0, %s138
      %s156 = sphi 0, %s156
      %s158 = sphi 0, %s156
      %s159 = sphi 0, %s158
      %s173 = sphi 0, %s159
    $region4: #{tpu_custom_call.1} parent=1 // loop_header_branch
      %24 = sbr.rel (%p22) target = $region8
    $region5: #{tpu_custom_call.1} parent=1 // loop_body
      %s26 = ssub.s32 %s21, 1
      %s27 = ssub.s32 %s21, 2
      %s34 = sadd.s32 1, %s29
      %p35 = scmp.ge.s32.totalorder %s34, 2
      %s36 = scalar_select %p35, 0, %s34
      %s37 = sadd.s32 1, %s28
      %s38 = scalar_select %p35, %s37, %s28
      %p39 = scmp.ge.s32.totalorder %s38, 2
      %s40 = scalar_select %p39, 0, %s38
      %s41 = ssub.s32 %s28, %s40
      %p42 = scmp.eq.s32.totalorder %s41, 0
      %s44 = sadd.s32 %s43, 1
      %s45 = scalar_select %p42, %s43, %s44
      %p48 = pneg %p42
      %p49 = scmp.eq.s32.totalorder %s21, 3
      %p50 = por %p48, %p49
      %p51 = scmp.ne.s32.totalorder %s43, %s46
      %p52 = scmp.eq.s32.totalorder %s21, 0
      %p53 = por %p51, %p52
      %p54 = scmp.ne.s32.totalorder %s43, %s46
      %p55 = scmp.eq.s32.totalorder %s26, 3
      %p56 = por %p54, %p55
      %p57 = scmp.ne.s32.totalorder %s46, %s47
      %p58 = scmp.eq.s32.totalorder %s26, 0
      %p59 = por %p57, %p58
      %p60 = scmp.ne.s32.totalorder %s46, %s47
      %p61 = scmp.eq.s32.totalorder %s27, 3
      %p62 = por %p60, %p61
      %p64 = scmp.ne.s32.totalorder %s47, %s63
      %p65 = scmp.eq.s32.totalorder %s27, 0
      %p66 = por %p64, %p65
      %s67 = ssub.s32 %s29, %s36
      %p68 = scmp.eq.s32.totalorder %s67, 0
      %s70 = sadd.s32 %s69, 1
      %s71 = scalar_select %p68, %s69, %s70
      %p74 = pneg %p68
      %p75 = scmp.eq.s32.totalorder %s21, 3
      %p76 = por %p74, %p75
      %p77 = scmp.ne.s32.totalorder %s69, %s72
      %p78 = scmp.eq.s32.totalorder %s21, 0
      %p79 = por %p77, %p78
      %p80 = scmp.ne.s32.totalorder %s69, %s72
      %p81 = scmp.eq.s32.totalorder %s26, 3
      %p82 = por %p80, %p81
      %p83 = scmp.ne.s32.totalorder %s72, %s73
      %p84 = scmp.eq.s32.totalorder %s26, 0
      %p85 = por %p83, %p84
      %p86 = scmp.ne.s32.totalorder %s72, %s73
      %p87 = scmp.eq.s32.totalorder %s27, 3
      %p88 = por %p86, %p87
      %p90 = scmp.ne.s32.totalorder %s73, %s89
      %p91 = scmp.eq.s32.totalorder %s27, 0
      %p92 = por %p90, %p91
      %s94 = sadd.s32 %s93, 1
      %p97 = scmp.eq.s32.totalorder %s21, 3
      %p98 = scmp.ne.s32.totalorder %s93, %s95
      %p99 = scmp.eq.s32.totalorder %s21, 0
      %p100 = por %p98, %p99
      %p101 = scmp.ne.s32.totalorder %s93, %s95
      %p102 = scmp.eq.s32.totalorder %s26, 3
      %p103 = por %p101, %p102
      %p104 = scmp.ne.s32.totalorder %s95, %s96
      %p105 = scmp.eq.s32.totalorder %s26, 0
      %p106 = por %p104, %p105
      %p107 = scmp.ne.s32.totalorder %s95, %s96
      %p108 = scmp.eq.s32.totalorder %s27, 3
      %p109 = por %p107, %p108
      %p111 = scmp.ne.s32.totalorder %s96, %s110
      %p112 = scmp.eq.s32.totalorder %s27, 0
      %p113 = por %p111, %p112
      %s115 = sadd.s32 %s114, 1
      %p118 = scmp.eq.s32.totalorder %s21, 3
      %p119 = scmp.ne.s32.totalorder %s114, %s116
      %p120 = scmp.eq.s32.totalorder %s21, 0
      %p121 = por %p119, %p120
      %p122 = scmp.ne.s32.totalorder %s114, %s116
      %p123 = scmp.eq.s32.totalorder %s26, 3
      %p124 = por %p122, %p123
      %p125 = scmp.ne.s32.totalorder %s116, %s117
      %p126 = scmp.eq.s32.totalorder %s26, 0
      %p127 = por %p125, %p126
      %p128 = scmp.ne.s32.totalorder %s116, %s117
      %p129 = scmp.eq.s32.totalorder %s27, 3
      %p130 = por %p128, %p129
      %p132 = scmp.ne.s32.totalorder %s117, %s131
      %p133 = scmp.eq.s32.totalorder %s27, 0
      %p134 = por %p132, %p133
      %s136 = sadd.s32 %s135, 1
      %p139 = scmp.eq.s32.totalorder %s21, 3
      %p140 = scmp.ne.s32.totalorder %s135, %s137
      %p141 = scmp.eq.s32.totalorder %s21, 0
      %p142 = por %p140, %p141
      %p143 = scmp.ne.s32.totalorder %s135, %s137
      %p144 = scmp.eq.s32.totalorder %s26, 3
      %p145 = por %p143, %p144
      %p146 = scmp.ne.s32.totalorder %s137, %s138
      %p147 = scmp.eq.s32.totalorder %s26, 0
      %p148 = por %p146, %p147
      %p149 = scmp.ne.s32.totalorder %s137, %s138
      %p150 = scmp.eq.s32.totalorder %s27, 3
      %p151 = por %p149, %p150
      %p153 = scmp.ne.s32.totalorder %s138, %s152
      %p154 = scmp.eq.s32.totalorder %s27, 0
      %p155 = por %p153, %p154
      %s157 = sadd.s32 %s156, 1
      %p160 = scmp.eq.s32.totalorder %s21, 3
      %p161 = scmp.ne.s32.totalorder %s156, %s158
      %p162 = scmp.eq.s32.totalorder %s21, 0
      %p163 = por %p161, %p162
      %p164 = scmp.ne.s32.totalorder %s156, %s158
      %p165 = scmp.eq.s32.totalorder %s26, 3
      %p166 = por %p164, %p165
      %p167 = scmp.ne.s32.totalorder %s158, %s159
      %p168 = scmp.eq.s32.totalorder %s26, 0
      %p169 = por %p167, %p168
      %p170 = scmp.ne.s32.totalorder %s158, %s159
      %p171 = scmp.eq.s32.totalorder %s27, 3
      %p172 = por %p170, %p171
      %p174 = scmp.ne.s32.totalorder %s159, %s173
      %p175 = scmp.eq.s32.totalorder %s27, 0
      %p176 = por %p174, %p175
      %p177 = scmp.le.s32.totalorder 1, %s21
      %p178 = scmp.lt.s32.totalorder %s21, 5
      %p179 = pnand %p177, %p178
      %p180 = pneg %p179
      // Predicated region
      $region9: #{tpu_custom_call.1} parent=5 // pred_check
        _
      $region10: #{tpu_custom_call.1} parent=5 // pred_check_branch
        %182 = sbr.rel (%p179) target = $region12
      $region11: #{tpu_custom_call.1} parent=5 // pred_region
        %s183 = ssub.s32 %s21, 1
      $region12: #{tpu_custom_call.1} parent=5 // pred_fallthru
        _
      %p184 = scmp.lt.s32.totalorder %s21, 4
      // Predicated region
      $region13: #{tpu_custom_call.1} parent=5 // pred_check
        %p185 = pneg %p184
      $region14: #{tpu_custom_call.1} parent=5 // pred_check_branch
        %187 = sbr.rel (%p185) target = $region16
      $region15: #{tpu_custom_call.1} parent=5 // pred_region
        // Predicated region
        $region17: #{tpu_custom_call.1} parent=15 // pred_check
          %p188 = pneg %p53
        $region18: #{tpu_custom_call.1} parent=15 // pred_check_branch
          %190 = sbr.rel (%p188) target = $region20
        $region19: #{tpu_custom_call.1} parent=15 // pred_region
          %s191 = sand.u32 %s43, 1
          %s192 = scalar_lea.sflag [#allocation15], %s191
          %s193 = sand.u32 %s43, 1
          %s194 = smul.addr %s193, 8
          %s195 = scalar_lea.vmem [#allocation14], %s194
          %s196 = smul.u32 2, %s28
          %s198 = ssub.s32 128, 128
          %199 = vsyncadd %s192, %s198
          %s200 = smul.addr %s196, 64
          %s201 = scalar_lea.hbm %s0, %s200
          %s202 = sshll.u32 %s195, 4
          %s203 = int_to_ptr.vmem [resolvable:$true] %s202
          %208 = dma.hbm_to_vmem [thread:$0]  %s201, 128, %s203, %s192, 64, 64, 4
        $region20: #{tpu_custom_call.1} parent=15 // pred_fallthru
          _
        // Predicated region
        $region21: #{tpu_custom_call.1} parent=15 // pred_check
          %p209 = pneg %p79
        $region22: #{tpu_custom_call.1} parent=15 // pred_check_branch
          %211 = sbr.rel (%p209) target = $region24
        $region23: #{tpu_custom_call.1} parent=15 // pred_region
          %s212 = sand.u32 %s69, 1
          %s213 = scalar_lea.sflag [#allocation18], %s212
          %s214 = sand.u32 %s69, 1
          %s215 = smul.addr %s214, 8
          %s216 = scalar_lea.vmem [#allocation17], %s215
          %s217 = smul.u32 2, %s29
          %s219 = ssub.s32 128, 128
          %220 = vsyncadd %s213, %s219
          %s221 = smul.addr %s217, 64
          %s222 = scalar_lea.hbm %s1, %s221
          %s223 = sshll.u32 %s216, 4
          %s224 = int_to_ptr.vmem [resolvable:$true] %s223
          %229 = dma.hbm_to_vmem [thread:$0]  %s222, 128, %s224, %s213, 64, 64, 4
        $region24: #{tpu_custom_call.1} parent=15 // pred_fallthru
          _
      $region16: #{tpu_custom_call.1} parent=5 // pred_fallthru
        _
      %p230 = scmp.le.s32.totalorder 1, %s21
      %p231 = scmp.lt.s32.totalorder %s21, 5
      %p232 = pnand %p230, %p231
      %p233 = pneg %p232
      // Predicated region
      $region25: #{tpu_custom_call.1} parent=5 // pred_check
        _
      $region26: #{tpu_custom_call.1} parent=5 // pred_check_branch
        %235 = sbr.rel (%p232) target = $region28
      $region27: #{tpu_custom_call.1} parent=5 // pred_region
        %s236 = ssub.s32 %s21, 1
        %s237 = sand.u32 %s46, 1
        %s238 = scalar_lea.sflag [#allocation15], %s237
        %s239 = sand.u32 %s46, 1
        %s240 = smul.addr %s239, 8
        %s241 = scalar_lea.vmem [#allocation14], %s240
        // Predicated region
        $region29: #{tpu_custom_call.1} parent=27 // pred_check
          %p242 = pneg %p59
        $region30: #{tpu_custom_call.1} parent=27 // pred_check_branch
          %244 = sbr.rel (%p242) target = $region32
        $region31: #{tpu_custom_call.1} parent=27 // pred_region
          %245 = dma.done %s238, 128
        $region32: #{tpu_custom_call.1} parent=27 // pred_fallthru
          _
        %s246 = sand.u32 %s72, 1
        %s247 = scalar_lea.sflag [#allocation18], %s246
        %s248 = sand.u32 %s72, 1
        %s249 = smul.addr %s248, 8
        %s250 = scalar_lea.vmem [#allocation17], %s249
        // Predicated region
        $region33: #{tpu_custom_call.1} parent=27 // pred_check
          %p251 = pneg %p85
        $region34: #{tpu_custom_call.1} parent=27 // pred_check_branch
          %253 = sbr.rel (%p251) target = $region36
        $region35: #{tpu_custom_call.1} parent=27 // pred_region
          %254 = dma.done %s247, 128
        $region36: #{tpu_custom_call.1} parent=27 // pred_fallthru
          _
        %s255 = sand.u32 %s46, 1
        %s256 = scalar_lea.sflag [#allocation15], %s255
        %s257 = sand.u32 %s46, 1
        %s258 = smul.addr %s257, 8
        %s259 = scalar_lea.vmem [#allocation14], %s258
        %p260 = pneg %p59
        %p261 = pneg %p56
        %s262 = sand.u32 %s72, 1
        %s263 = scalar_lea.sflag [#allocation18], %s262
        %s264 = sand.u32 %s72, 1
        %s265 = smul.addr %s264, 8
        %s266 = scalar_lea.vmem [#allocation17], %s265
        %p267 = pneg %p85
        %p268 = pneg %p82
        %p269 = pneg %p106
        %p270 = pneg %p103
        %p271 = pneg %p127
        %p272 = pneg %p124
        %p273 = pneg %p148
        %p274 = pneg %p145
        %p275 = pneg %p169
        %p276 = pneg %p166
        %s277 = smul.u32 2, %s30
        %s278 = smul.u32 2, %s31
        %p280 = scmp.eq.s32.totalorder %s30, 0
        %p281 = scmp.eq.s32.totalorder %s31, 0
        %p282 = pnand %p280, %p281
        %p283 = pneg %p282
        // Predicated region
        $region37: #{tpu_custom_call.1} parent=27 // pred_check
          _
        $region38: #{tpu_custom_call.1} parent=27 // pred_check_branch
          %285 = sbr.rel (%p282) target = $region40
        $region39: #{tpu_custom_call.1} parent=27 // pred_region
          %vm286 = vcmask 0
          %287 = vst.msk [vmem:[#allocation8] sm:$0x1] %vm286, 0.0
          %288 = vst.msk [vmem:[#allocation9] sm:$0x1] %vm286, 0.0
          %289 = vst.msk [vmem:[#allocation10] sm:$0x1] %vm286, 0.0
          %290 = vst.msk [vmem:[#allocation11] sm:$0x1] %vm286, 0.0
          %291 = vst.msk [vmem:[#allocation12] sm:$0x1] %vm286, 0.0
          %292 = vst.msk [vmem:[#allocation13] sm:$0x1] %vm286, 0.0
        $region40: #{tpu_custom_call.1} parent=27 // pred_fallthru
          _
        // Predicated region
        $region41: #{tpu_custom_call.1} parent=27 // pred_check
          %p293 = pneg %p281
        $region42: #{tpu_custom_call.1} parent=27 // pred_check_branch
          %295 = sbr.rel (%p293) target = $region44
        $region43: #{tpu_custom_call.1} parent=27 // pred_region
          %vm296 = vcmask 7168
          %297 = vst.msk [vmem:[#allocation2] sm:$0xff] %vm296, -inf
          %298 = vst.msk [vmem:[#allocation2 + $0x8] sm:$0xff] %vm296, -inf
          %299 = vst.msk [vmem:[#allocation3] sm:$0xff] %vm296, 0.0
          %300 = vst.msk [vmem:[#allocation3 + $0x8] sm:$0xff] %vm296, 0.0
          %301 = vst.msk [vmem:[#allocation4] sm:$0xff] %vm296, 0
          %302 = vst.msk [vmem:[#allocation4 + $0x8] sm:$0xff] %vm296, 0
        $region44: #{tpu_custom_call.1} parent=27 // pred_fallthru
          _
        // Predicated region
        $region45: #{tpu_custom_call.1} parent=27 // pred_check
          %p303 = pneg %p280
        $region46: #{tpu_custom_call.1} parent=27 // pred_check_branch
          %305 = sbr.rel (%p303) target = $region48
        $region47: #{tpu_custom_call.1} parent=27 // pred_region
          %s306 = scalar_lea.vmem [#allocation5], %s31
          %vm307 = vcmask 122880
          %308 = vst.msk [vmem:[%s306] sm:$0x1] %vm307, -inf
          %s309 = scalar_lea.vmem [#allocation6], %s31
          %310 = vst.msk [vmem:[%s309] sm:$0x1] %vm307, 0.0
          %s311 = scalar_lea.vmem [#allocation7], %s31
          %312 = vst.msk [vmem:[%s311] sm:$0x1] %vm307, 0
        $region48: #{tpu_custom_call.1} parent=27 // pred_fallthru
          _
        %v313 = vld [vmem:[%s241] sm:$0xf]
        %v314 = vld [vmem:[%s241 + $0x4] sm:$0xf]
        %v315 = vld [vmem:[%s250] sm:$0xf]
        %v316 = vld [vmem:[%s250 + $0x4] sm:$0xf]
        %v319 = vunpack.c.l.b16 %v313
        %v320 = vunpack.c.l.b16 %v314
        %v321 = vpack.c.b16 %v320, %v319
        %v324 = vunpack.c.l.b16 %v315
        %v325 = vunpack.c.l.b16 %v316
        %v326 = vpack.c.b16 %v325, %v324
        %vm327 = vcmask 261120
        %v329 = vsel %vm327, %v321, 0
        %v332 = vsel %vm327, %v326, 0
        %334 = vmatprep.subr.bf16.mxu0 0
        %335 = vmatpush1.bf16.xpose.msra.mxu0 0
        %336 = vmatprep.subr.bf16.mxu0 0
        %337 = vmatpush1.bf16.xpose.msra.mxu0 0
        %338 = vmatprep.subr.bf16.mxu0 0
        %339 = vmatpush1.bf16.xpose.msra.mxu0 0
        %340 = vmatprep.subr.bf16.mxu0 0
        %341 = vmatpush1.bf16.xpose.msra.mxu0 0
        %342 = vmatprep.subr.bf16.mxu0 0
        %343 = vmatpush1.bf16.xpose.msra.mxu0 0
        %344 = vmatprep.subr.bf16.mxu0 0
        %345 = vmatpush1.bf16.xpose.msra.mxu0 0
        %346 = vmatprep.subr.bf16.mxu0 0
        %347 = vmatpush1.bf16.xpose.msra.mxu0 0
        %348 = vmatprep.subr.bf16.mxu0 0
        %349 = vmatpush1.bf16.xpose.msra.mxu0 %v332
        %350 = vmatprep.subr.bf16.mxu0 0
        %351 = vmatpush2.bf16.xpose.msra.mxu0 0
        %352 = vmatprep.subr.bf16.mxu0 0
        %353 = vmatpush2.bf16.xpose.msra.mxu0 0
        %354 = vmatprep.subr.bf16.mxu0 0
        %355 = vmatpush2.bf16.xpose.msra.mxu0 0
        %356 = vmatprep.subr.bf16.mxu0 0
        %357 = vmatpush2.bf16.xpose.msra.mxu0 0
        %358 = vmatprep.subr.bf16.mxu0 0
        %359 = vmatpush2.bf16.xpose.msra.mxu0 0
        %360 = vmatprep.subr.bf16.mxu0 0
        %361 = vmatpush2.bf16.xpose.msra.mxu0 0
        %362 = vmatprep.subr.bf16.mxu0 0
        %363 = vmatpush2.bf16.xpose.msra.mxu0 0
        %364 = vmatprep.subr.bf16.mxu0 0
        %365 = vmatpush2.bf16.xpose.msra.mxu0 0
        %366 = vmatprep.mubr.bf16.mxu0 0
        %367 = vmatmul.mubr.bf16.gmra.mxu0 %v329
        %v368 = vpop.f32.mrf.mxu0
        %v369 = vadd.f32 0.0, %v368
        %v370 = vpop.f32.mrf.mxu0
        %v371 = vpop.f32.mrf.mxu0
        %v372 = vadd.f32 0.0, %v371
        %v373 = vpop.f32.mrf.mxu0
        %374 = vdwg.mxu0
        %p375 = scmp.eq.s32.totalorder %s31, %s30
        // Predicated region
        $region49: #{tpu_custom_call.1} parent=27 // pred_check
          %p376 = pneg %p375
        $region50: #{tpu_custom_call.1} parent=27 // pred_check_branch
          %378 = sbr.rel (%p376) target = $region52
        $region51: #{tpu_custom_call.1} parent=27 // pred_region
          %v379 = vunpack.c.l.bf16 %v313
          %v380 = vunpack.c.l.bf16 %v314
          %v381 = vunpack.c.l.bf16 %v315
          %v382 = vunpack.c.l.bf16 %v316
          %v383 = vmul.f32 %v379, %v381
          %v384 = vmul.f32 %v380, %v382
          %v385 = vsel %vm327, %v383, 0.0
          %386 = vadd.xlane.f32.xlu0 %v385
          %v387 = vpop.xlane.xlu0 %386
          %v388 = vsel %vm327, %v384, 0.0
          %389 = vadd.xlane.f32.xlu0 %v388
          %v390 = vpop.xlane.xlu0 %389
          %v391 = vld [vmem:[#allocation10] sm:$0x1]
          %vm392 = vcmask 7168
          %v393 = vsel %vm392, %v387, 0.0
          %v394 = vsel %vm392, %v390, 0.0
          %v395 = vadd.f32 %v393, %v394
          %396 = vadd.xlane.f32.xlu0 %v395
          %v397 = vpop.xlane.xlu0 %396
          %v398 = vrot.slane %v397, 4
          %v399 = vadd.f32 %v397, %v398
          %v400 = vrot.slane %v399, 2
          %v401 = vadd.f32 %v399, %v400
          %v402 = vrot.slane %v401, 1
          %v403 = vadd.f32 %v401, %v402
          %s404 = vtos %v403
          %v405 = vstv %s404
          %v406 = vadd.f32 %v391, %v405
          %vm407 = vcmask 0
          %408 = vst.msk [vmem:[#allocation10] sm:$0x1] %vm407, %v406
        $region52: #{tpu_custom_call.1} parent=27 // pred_fallthru
          _
        %vm409 = vcmask 130048
        %v410 = vsel %vm409, %v369, -inf
        %411 = vmax.xlane.f32.xlu0 %v410
        %v412 = vpop.xlane.xlu0 %411
        %v413 = vsel %vm409, %v372, -inf
        %414 = vmax.xlane.f32.xlu0 %v413
        %v415 = vpop.xlane.xlu0 %414
        %v416 = vld [vmem:[#allocation2] sm:$0xff]
        %v417 = vld [vmem:[#allocation2 + $0x8] sm:$0xff]
        %v418 = vmax.f32 %v416, %v412
        %v419 = vmax.f32 %v417, %v415
        %s420 = smul.u32 %s31, 16
        %v421 = vlaneseq
        %v422 = vand.u32 %v421, 127
        %v423 = vstv %s420
        %v424 = vadd.s32 %v423, %v422
        %vm425 = vcmp.ge.f32.partialorder %v369, %v412
        %vm426 = vcmp.ge.f32.partialorder %v372, %v415
        %v427 = vsel %vm425, %v424, 1073741824
        %v428 = vsel %vm426, %v424, 1073741824
        %v429 = vsel %vm409, %v427, 2147483647
        %v430 = vand.u32 %v429, 65535
        %v431 = vshra.s32 %v429, 16
        %v432 = vcvt.s32.f32 %v430
        %v433 = vcvt.s32.f32 %v431
        %434 = vmin.xlane.f32.xlu0 %v433
        %v435 = vpop.xlane.xlu0 %434
        %vm436 = vcmp.eq.f32.partialorder %v433, %v435
        %v437 = vsel %vm436, %v432, inf
        %438 = vmin.xlane.f32.xlu0 %v437
        %v439 = vpop.xlane.xlu0 %438
        %v440 = vcvt.f32.s32 %v439
        %v441 = vcvt.f32.s32 %v435
        %v442 = vshll.u32 %v441, 16
        %v443 = vadd.s32 %v442, %v440
        %v444 = vsel %vm409, %v428, 2147483647
        %v445 = vand.u32 %v444, 65535
        %v446 = vshra.s32 %v444, 16
        %v447 = vcvt.s32.f32 %v445
        %v448 = vcvt.s32.f32 %v446
        %449 = vmin.xlane.f32.xlu0 %v448
        %v450 = vpop.xlane.xlu0 %449
        %vm451 = vcmp.eq.f32.partialorder %v448, %v450
        %v452 = vsel %vm451, %v447, inf
        %453 = vmin.xlane.f32.xlu0 %v452
        %v454 = vpop.xlane.xlu0 %453
        %v455 = vcvt.f32.s32 %v454
        %v456 = vcvt.f32.s32 %v450
        %v457 = vshll.u32 %v456, 16
        %v458 = vadd.s32 %v457, %v455
        %v459 = vld [vmem:[#allocation3] sm:$0xff]
        %v460 = vld [vmem:[#allocation3 + $0x8] sm:$0xff]
        %v461 = vsub.f32 %v416, %v418
        %v462 = vsub.f32 %v417, %v419
        %v463 = vmul.f32 %v461, 1.442695
        %v464 = vpow.pop %v463
        %v465 = vmul.f32 %v462, 1.442695
        %v466 = vpow.pop %v465
        %v467 = vmul.f32 %v459, %v464
        %v468 = vmul.f32 %v460, %v466
        %470 = vset.pattern.permute.xlu0 0
        %471 = vperm.xlu0 %470, %v418
        %v472 = vpop.permute.xlu0 %471
        %475 = vset.pattern.permute.xlu0 0
        %476 = vperm.xlu0 %475, %v419
        %v477 = vpop.permute.xlu0 %476
        %v479 = vsub.f32 %v369, %v472
        %v480 = vsub.f32 %v372, %v477
        %v481 = vmul.f32 %v479, 1.442695
        %v482 = vpow.pop %v481
        %v483 = vmul.f32 %v480, 1.442695
        %v484 = vpow.pop %v483
        %v485 = vsel %vm409, %v482, 0.0
        %486 = vadd.xlane.f32.xlu0 %v485
        %v487 = vpop.xlane.xlu0 %486
        %v488 = vsel %vm409, %v484, 0.0
        %489 = vadd.xlane.f32.xlu0 %v488
        %v490 = vpop.xlane.xlu0 %489
        %v491 = vadd.f32 %v467, %v487
        %v492 = vadd.f32 %v468, %v490
        %vm493 = vcmask 7168
        %494 = vst.msk [vmem:[#allocation3] sm:$0xff] %vm493, %v491
        %495 = vst.msk [vmem:[#allocation3 + $0x8] sm:$0xff] %vm493, %v492
        %vm496 = vcmp.gt.f32.partialorder %v412, %v416
        %vm497 = vcmp.gt.f32.partialorder %v415, %v417
        %v498 = vld [vmem:[#allocation4] sm:$0xff]
        %v499 = vld [vmem:[#allocation4 + $0x8] sm:$0xff]
        %v500 = vsel %vm496, %v443, %v498
        %v501 = vsel %vm497, %v458, %v499
        %502 = vst.msk [vmem:[#allocation4] sm:$0xff] %vm493, %v500
        %503 = vst.msk [vmem:[#allocation4 + $0x8] sm:$0xff] %vm493, %v501
        %504 = vst.msk [vmem:[#allocation2] sm:$0xff] %vm493, %v418
        %505 = vst.msk [vmem:[#allocation2 + $0x8] sm:$0xff] %vm493, %v419
        %v506 = vmax.f32 %v410, %v413
        %v507 = vrot.slane %v506, 4
        %v508 = vmax.f32 %v506, %v507
        %v509 = vrot.slane %v508, 2
        %v510 = vmax.f32 %v508, %v509
        %v511 = vrot.slane %v510, 1
        %v512 = vmax.f32 %v510, %v511
        %s513 = scalar_lea.vmem [#allocation5], %s31
        %v514 = vld [vmem:[%s513] sm:$0x1]
        %v515 = vmax.f32 %v514, %v512
        %s516 = smul.u32 %s30, 16
        %v517 = vlaneseq
        %v518 = vshrl.u32 %v517, 7
        %v519 = vadd.s32 %v518, 8
        %v520 = vstv %s516
        %v521 = vadd.s32 %v520, %v518
        %v522 = vadd.s32 %v520, %v519
        %vm523 = vcmp.ge.f32.partialorder %v369, %v512
        %vm524 = vcmp.ge.f32.partialorder %v372, %v512
        %v525 = vsel %vm523, %v521, 1073741824
        %v526 = vsel %vm524, %v522, 1073741824
        %v527 = vsel %vm409, %v525, 2147483647
        %v528 = vsel %vm409, %v526, 2147483647
        %vm529 = vcmp.lt.s32.totalorder %v527, %v528
        %v530 = vsel %vm529, %v527, %v528
        %v531 = vrot.slane %v530, 4
        %vm532 = vcmp.lt.s32.totalorder %v530, %v531
        %v533 = vsel %vm532, %v530, %v531
        %v534 = vrot.slane %v533, 2
        %vm535 = vcmp.lt.s32.totalorder %v533, %v534
        %v536 = vsel %vm535, %v533, %v534
        %v537 = vrot.slane %v536, 1
        %vm538 = vcmp.lt.s32.totalorder %v536, %v537
        %v539 = vsel %vm538, %v536, %v537
        %s540 = scalar_lea.vmem [#allocation6], %s31
        %v541 = vld [vmem:[%s540] sm:$0x1]
        %v542 = vsub.f32 %v514, %v515
        %v543 = vmul.f32 %v542, 1.442695
        %v544 = vpow.pop %v543
        %v545 = vmul.f32 %v541, %v544
        %v547 = vlaneseq
        %v548 = vshrl.u32 %v547, 7
        %v549 = vsub.s32 0, %v548
        %v550 = vrot.slane %v515, %v549
        %v552 = vsub.f32 %v369, %v550
        %v553 = vsub.f32 %v372, %v550
        %v554 = vmul.f32 %v552, 1.442695
        %v555 = vpow.pop %v554
        %v556 = vmul.f32 %v553, 1.442695
        %v557 = vpow.pop %v556
        %v558 = vsel %vm409, %v555, 0.0
        %v559 = vsel %vm409, %v557, 0.0
        %v560 = vadd.f32 %v558, %v559
        %v561 = vrot.slane %v560, 4
        %v562 = vadd.f32 %v560, %v561
        %v563 = vrot.slane %v562, 2
        %v564 = vadd.f32 %v562, %v563
        %v565 = vrot.slane %v564, 1
        %v566 = vadd.f32 %v564, %v565
        %v567 = vadd.f32 %v545, %v566
        %vm568 = vcmask 122880
        %569 = vst.msk [vmem:[%s540] sm:$0x1] %vm568, %v567
        %vm570 = vcmp.gt.f32.partialorder %v512, %v514
        %s571 = scalar_lea.vmem [#allocation7], %s31
        %v572 = vld [vmem:[%s571] sm:$0x1]
        %v573 = vsel %vm570, %v539, %v572
        %574 = vst.msk [vmem:[%s571] sm:$0x1] %vm568, %v573
        %575 = vst.msk [vmem:[%s513] sm:$0x1] %vm568, %v515
        %p576 = scmp.eq.s32.totalorder %s31, 1
        // Predicated region
        $region53: #{tpu_custom_call.1} parent=27 // pred_check
          %p577 = pneg %p576
        $region54: #{tpu_custom_call.1} parent=27 // pred_check_branch
          %579 = sbr.rel (%p577) target = $region56
        $region55: #{tpu_custom_call.1} parent=27 // pred_region
          %v580 = vld [vmem:[#allocation2] sm:$0xff]
          %v581 = vld [vmem:[#allocation2 + $0x8] sm:$0xff]
          %v582 = vld [vmem:[#allocation3] sm:$0xff]
          %v583 = vld [vmem:[#allocation3 + $0x8] sm:$0xff]
          %v584 = vlog2.pop %v582
          %v585 = vmul.f32 %v584, 0.6931472
          %v586 = vlog2.pop %v583
          %v587 = vmul.f32 %v586, 0.6931472
          %v588 = vadd.f32 %v580, %v585
          %v589 = vadd.f32 %v581, %v587
          %v590 = vld [vmem:[#allocation8] sm:$0x1]
          %v591 = vsel %vm493, %v588, 0.0
          %v592 = vsel %vm493, %v589, 0.0
          %v593 = vadd.f32 %v591, %v592
          %594 = vadd.xlane.f32.xlu0 %v593
          %v595 = vpop.xlane.xlu0 %594
          %v596 = vrot.slane %v595, 4
          %v597 = vadd.f32 %v595, %v596
          %v598 = vrot.slane %v597, 2
          %v599 = vadd.f32 %v597, %v598
          %v600 = vrot.slane %v599, 1
          %v601 = vadd.f32 %v599, %v600
          %s602 = vtos %v601
          %v603 = vstv %s602
          %v604 = vadd.f32 %v590, %v603
          %vm605 = vcmask 0
          %606 = vst.msk [vmem:[#allocation8] sm:$0x1] %vm605, %v604
          %v607 = vld [vmem:[#allocation12] sm:$0x1]
          %v608 = vld [vmem:[#allocation4] sm:$0xff]
          %v609 = vld [vmem:[#allocation4 + $0x8] sm:$0xff]
          %vm610 = vcmp.eq.s32.totalorder %v608, %v521
          %vm611 = vcmp.eq.s32.totalorder %v609, %v522
          %v612 = vsel %vm610, 1, 0
          %v613 = vsel %vm611, 1, 0
          %v614 = vcvt.s32.f32 %v612
          %v615 = vcvt.s32.f32 %v613
          %v616 = vsel %vm493, %v614, 0.0
          %v617 = vsel %vm493, %v615, 0.0
          %v618 = vadd.f32 %v616, %v617
          %619 = vadd.xlane.f32.xlu0 %v618
          %v620 = vpop.xlane.xlu0 %619
          %v621 = vrot.slane %v620, 4
          %v622 = vadd.f32 %v620, %v621
          %v623 = vrot.slane %v622, 2
          %v624 = vadd.f32 %v622, %v623
          %v625 = vrot.slane %v624, 1
          %v626 = vadd.f32 %v624, %v625
          %s627 = vtos %v626
          %v628 = vstv %s627
          %v629 = vadd.f32 %v607, %v628
          %630 = vst.msk [vmem:[#allocation12] sm:$0x1] %vm605, %v629
        $region56: #{tpu_custom_call.1} parent=27 // pred_fallthru
          _
        %p631 = scmp.eq.s32.totalorder %s30, 1
        // Predicated region
        $region57: #{tpu_custom_call.1} parent=27 // pred_check
          %p632 = pneg %p631
        $region58: #{tpu_custom_call.1} parent=27 // pred_check_branch
          %634 = sbr.rel (%p632) target = $region60
        $region59: #{tpu_custom_call.1} parent=27 // pred_region
          %v635 = vld [vmem:[%s513] sm:$0x1]
          %v636 = vld [vmem:[%s540] sm:$0x1]
          %v637 = vlog2.pop %v636
          %v638 = vmul.f32 %v637, 0.6931472
          %v639 = vadd.f32 %v635, %v638
          %v640 = vld [vmem:[#allocation9] sm:$0x1]
          %v641 = vsel %vm568, %v639, 0.0
          %642 = vadd.xlane.f32.xlu0 %v641
          %v643 = vpop.xlane.xlu0 %642
          %v644 = vrot.slane %v643, 4
          %v645 = vadd.f32 %v643, %v644
          %v646 = vrot.slane %v645, 2
          %v647 = vadd.f32 %v645, %v646
          %v648 = vrot.slane %v647, 1
          %v649 = vadd.f32 %v647, %v648
          %s650 = vtos %v649
          %v651 = vstv %s650
          %v652 = vadd.f32 %v640, %v651
          %vm653 = vcmask 0
          %654 = vst.msk [vmem:[#allocation9] sm:$0x1] %vm653, %v652
          %v655 = vld [vmem:[#allocation13] sm:$0x1]
          %v656 = vld [vmem:[%s571] sm:$0x1]
          %vm657 = vcmp.eq.s32.totalorder %v656, %v424
          %v658 = vsel %vm657, 1, 0
          %v659 = vcvt.s32.f32 %v658
          %v660 = vsel %vm568, %v659, 0.0
          %661 = vadd.xlane.f32.xlu0 %v660
          %v662 = vpop.xlane.xlu0 %661
          %v663 = vrot.slane %v662, 4
          %v664 = vadd.f32 %v662, %v663
          %v665 = vrot.slane %v664, 2
          %v666 = vadd.f32 %v664, %v665
          %v667 = vrot.slane %v666, 1
          %v668 = vadd.f32 %v666, %v667
          %s669 = vtos %v668
          %v670 = vstv %s669
          %v671 = vadd.f32 %v655, %v670
          %672 = vst.msk [vmem:[#allocation13] sm:$0x1] %vm653, %v671
        $region60: #{tpu_custom_call.1} parent=27 // pred_fallthru
          _
        %p673 = pnand %p631, %p576
        %p674 = pneg %p673
        // Predicated region
        $region61: #{tpu_custom_call.1} parent=27 // pred_check
          _
        $region62: #{tpu_custom_call.1} parent=27 // pred_check_branch
          %676 = sbr.rel (%p673) target = $region64
        $region63: #{tpu_custom_call.1} parent=27 // pred_region
          %v677 = vld [vmem:[#allocation10] sm:$0x1]
          %v678 = vld [vmem:[#allocation8] sm:$0x1]
          %v679 = vsub.f32 %v678, %v677
          %v680 = vmul.f32 %v679, 0.03125
          %vm681 = vcmask 0
          %682 = vst.msk [vmem:[#allocation19] sm:$0x1] %vm681, %v680
          %v683 = vld [vmem:[#allocation9] sm:$0x1]
          %v684 = vsub.f32 %v683, %v677
          %v685 = vmul.f32 %v684, 0.03125
          %686 = vst.msk [vmem:[#allocation20] sm:$0x1] %vm681, %v685
          %v687 = vld [vmem:[#allocation12] sm:$0x1]
          %v688 = vmul.f32 %v687, 100.0
          %v689 = vmul.f32 %v688, 0.03125
          %690 = vst.msk [vmem:[#allocation22] sm:$0x1] %vm681, %v689
          %v691 = vld [vmem:[#allocation13] sm:$0x1]
          %v692 = vmul.f32 %v691, 100.0
          %v693 = vmul.f32 %v692, 0.03125
          %694 = vst.msk [vmem:[#allocation23] sm:$0x1] %vm681, %v693
        $region64: #{tpu_custom_call.1} parent=27 // pred_fallthru
          _
        // Predicated region
        $region65: #{tpu_custom_call.1} parent=27 // pred_check
          %p695 = pneg %p103
        $region66: #{tpu_custom_call.1} parent=27 // pred_check_branch
          %697 = sbr.rel (%p695) target = $region68
        $region67: #{tpu_custom_call.1} parent=27 // pred_region
          %s699 = ssub.s32 16, 16
          %700 = vsyncadd [#allocation16], %s699
          %s702 = sshll.u32 [#allocation19], 4
          %s703 = int_to_ptr.vmem [resolvable:$true] %s702
          %705 = dma.vmem_to_hbm [thread:$0]  %s703, 16, %s2, [#allocation16]
        $region68: #{tpu_custom_call.1} parent=27 // pred_fallthru
          _
        // Predicated region
        $region69: #{tpu_custom_call.1} parent=27 // pred_check
          %p706 = pneg %p124
        $region70: #{tpu_custom_call.1} parent=27 // pred_check_branch
          %708 = sbr.rel (%p706) target = $region72
        $region71: #{tpu_custom_call.1} parent=27 // pred_region
          %s710 = ssub.s32 16, 16
          %711 = vsyncadd [#allocation21], %s710
          %s713 = sshll.u32 [#allocation20], 4
          %s714 = int_to_ptr.vmem [resolvable:$true] %s713
          %716 = dma.vmem_to_hbm [thread:$0]  %s714, 16, %s3, [#allocation21]
        $region72: #{tpu_custom_call.1} parent=27 // pred_fallthru
          _
        // Predicated region
        $region73: #{tpu_custom_call.1} parent=27 // pred_check
          %p717 = pneg %p145
        $region74: #{tpu_custom_call.1} parent=27 // pred_check_branch
          %719 = sbr.rel (%p717) target = $region76
        $region75: #{tpu_custom_call.1} parent=27 // pred_region
          %s721 = ssub.s32 16, 16
          %722 = vsyncadd [#allocation21], %s721
          %s724 = sshll.u32 [#allocation22], 4
          %s725 = int_to_ptr.vmem [resolvable:$true] %s724
          %727 = dma.vmem_to_hbm [thread:$0]  %s725, 16, %s4, [#allocation21]
        $region76: #{tpu_custom_call.1} parent=27 // pred_fallthru
          _
        // Predicated region
        $region77: #{tpu_custom_call.1} parent=27 // pred_check
          %p728 = pneg %p166
        $region78: #{tpu_custom_call.1} parent=27 // pred_check_branch
          %730 = sbr.rel (%p728) target = $region80
        $region79: #{tpu_custom_call.1} parent=27 // pred_region
          %s732 = ssub.s32 16, 16
          %733 = vsyncadd [#allocation24], %s732
          %s735 = sshll.u32 [#allocation23], 4
          %s736 = int_to_ptr.vmem [resolvable:$true] %s735
          %738 = dma.vmem_to_hbm [thread:$0]  %s736, 16, %s5, [#allocation24]
        $region80: #{tpu_custom_call.1} parent=27 // pred_fallthru
          _
        // Predicated region
        $region81: #{tpu_custom_call.1} parent=27 // pred_check
          %p739 = pneg %p103
        $region82: #{tpu_custom_call.1} parent=27 // pred_check_branch
          %741 = sbr.rel (%p739) target = $region84
        $region83: #{tpu_custom_call.1} parent=27 // pred_region
          %742 = dma.done [#allocation16], 16
        $region84: #{tpu_custom_call.1} parent=27 // pred_fallthru
          _
        // Predicated region
        $region85: #{tpu_custom_call.1} parent=27 // pred_check
          %p743 = pneg %p124
        $region86: #{tpu_custom_call.1} parent=27 // pred_check_branch
          %745 = sbr.rel (%p743) target = $region88
        $region87: #{tpu_custom_call.1} parent=27 // pred_region
          %746 = dma.done [#allocation21], 16
        $region88: #{tpu_custom_call.1} parent=27 // pred_fallthru
          _
        // Predicated region
        $region89: #{tpu_custom_call.1} parent=27 // pred_check
          %p747 = pneg %p145
        $region90: #{tpu_custom_call.1} parent=27 // pred_check_branch
          %749 = sbr.rel (%p747) target = $region92
        $region91: #{tpu_custom_call.1} parent=27 // pred_region
          %750 = dma.done [#allocation21], 16
        $region92: #{tpu_custom_call.1} parent=27 // pred_fallthru
          _
        // Predicated region
        $region93: #{tpu_custom_call.1} parent=27 // pred_check
          %p751 = pneg %p166
        $region94: #{tpu_custom_call.1} parent=27 // pred_check_branch
          %753 = sbr.rel (%p751) target = $region96
        $region95: #{tpu_custom_call.1} parent=27 // pred_region
          %754 = dma.done [#allocation24], 16
        $region96: #{tpu_custom_call.1} parent=27 // pred_fallthru
          _
      $region28: #{tpu_custom_call.1} parent=5 // pred_fallthru
        _
      %p755 = scmp.le.s32.totalorder 2, %s21
      // Predicated region
      $region97: #{tpu_custom_call.1} parent=5 // pred_check
        %p756 = pneg %p755
      $region98: #{tpu_custom_call.1} parent=5 // pred_check_branch
        %758 = sbr.rel (%p756) target = $region100
      $region99: #{tpu_custom_call.1} parent=5 // pred_region
        %s759 = ssub.s32 %s21, 2
      $region100: #{tpu_custom_call.1} parent=5 // pred_fallthru
        _
    $region6: #{tpu_custom_call.1} parent=1 // loop_footer
      %s25 = sadd.s32 1, %s21
    $region7: #{tpu_custom_call.1} parent=1 // loop_footer_branch
      %20 = sbr.rel target = $region3
    $region8: #{tpu_custom_call.1} parent=1 // loop_exit
      _
    %760 = vsyncpa [#allocation15], 1
    %s761 = scalar_lea.sflag [#allocation15], 1
    %762 = vsyncpa %s761, 1
    %763 = vsyncpa [#allocation18], 1
    %s764 = scalar_lea.sflag [#allocation18], 1
    %765 = vsyncpa %s764, 1
    %766 = vsyncpa [#allocation16], 1
    %s767 = scalar_lea.sflag [#allocation16], 1
    %768 = vsyncpa %s767, 1
    %769 = vsyncpa [#allocation21], 1
    %770 = vsyncpa [#allocation24], 1

</llo_original>
